<compile_context>
chip_gen: v7x
topology: tpu7x:2x2x1
jax: 0.10.0
libtpu: 0.0.40
codegen_flags: <defaults>
</compile_context>

<pallas_src>
import jax
import jax.numpy as jnp
from jax.experimental import pallas as pl
from jax.experimental.pallas import tpu as pltpu


# ----------------------------- configuration --------------------------------
IN_CHANS = 1
IMG_HW = 16
PATCH = 4
NUM_PATCHES = (IMG_HW // PATCH) * (IMG_HW // PATCH)     # P = 16
PATCH_K = PATCH * PATCH * IN_CHANS                      # K = 16 values / patch
NUM_FEATURES = 32                                       # backbone num_features
PACKED_K = NUM_PATCHES * PATCH_K                        # 256  lane-dense input width
PACKED_F = NUM_PATCHES * NUM_FEATURES                   # 512  lane-dense hidden width
TREND_CLASSES = 3
STOCK_CLASSES = 8
INDUSTRY_CLASSES = 4
NUM_HEAD_OUT = TREND_CLASSES + STOCK_CLASSES + INDUSTRY_CLASSES   # 15
HEAD_PAD = 128                                          # lane-dense output width
DROPOUT_P = 0.1                                         # eval mode -> identity
TN_MAX = 1024                                           # max batch tile (samples)
MIN_GRID_STEPS = 2                                      # v7x: 2 TensorCores / chip


def _cdiv(a, b):
    return -(-a // b)


def _round_up(a, b):
    return _cdiv(a, b) * b


# ------------------------------- Pallas kernel -------------------------------
def stocknet_kernel(x_ref,                 # (TN, 256)  bf16  packed patches
                    w1_ref, b1_ref,        # (256, 512) bf16, (1, 512) f32   patch-embed (block-diag)
                    w2_ref, b2_ref,        # (512, 512) bf16, (1, 512) f32   1x1 conv (block-diag)
                    wc_ref, bc_ref,        # (512, 128) bf16, (1, 128) f32   fused heads (pool folded in)
                    out_ref):              # (TN, 128)  f32   fused logits
    # backbone stage 1: patch-embed conv (stride==kernel) as one lane-dense matmul + bias + ReLU
    h = jnp.dot(x_ref[...], w1_ref[...], preferred_element_type=jnp.float32)
    h = jnp.maximum(h + b1_ref[...], 0.0).astype(jnp.bfloat16)   # keep bf16 only (halves VMEM/vst)

    # backbone stage 2: 1x1 conv as a second lane-dense matmul + bias + ReLU
    h = jnp.dot(h, w2_ref[...], preferred_element_type=jnp.float32)
    h = jnp.maximum(h + b2_ref[...], 0.0).astype(jnp.bfloat16)   # (TN, 512) bf16

    # AdaptiveAvgPool2d + flatten + dropout(eval: identity) + 3 fused heads:
    # the mean over patches is folded into wc (stacked per patch group, 1/P baked in),
    # so this is a single bf16 x bf16 -> f32 MXU matmul with an unmasked 128-lane store.
    out_ref[...] = (jnp.dot(h, wc_ref[...], preferred_element_type=jnp.float32)
                    + bc_ref[...])


# ------------------------------- wrapper -------------------------------------
def _extract_patches_packed(x_nchw):
    """NCHW -> (N, P*K) f32: each row holds all 16 flattened 4x4 patches of one image."""
    n, c, h, w = x_nchw.shape
    x_nhwc = jnp.transpose(x_nchw, (0, 2, 3, 1))
    p = x_nhwc.reshape(n, h // PATCH, PATCH, w // PATCH, PATCH, c)
    p = jnp.transpose(p, (0, 1, 3, 2, 4, 5))            # (n, ph, pw, 4, 4, c)
    return p.reshape(n, NUM_PATCHES * PATCH * PATCH * c)


def _extract_patches_rows(x_nchw):
    """NCHW -> (N*P, K) f32 (reference layout)."""
    n = x_nchw.shape[0]
    return _extract_patches_packed(x_nchw).reshape(n * NUM_PATCHES, PATCH_K)


def _prep_weights(params):
    """Build lane-dense block-diagonal / stacked weights for the packed layout."""
    eye = jnp.eye(NUM_PATCHES, dtype=jnp.float32)
    w1_blk = jnp.kron(eye, params['w1']).astype(jnp.bfloat16)          # (256, 512)
    w2_blk = jnp.kron(eye, params['w2']).astype(jnp.bfloat16)          # (512, 512)
    b1_blk = jnp.tile(params['b1'].astype(jnp.float32), (1, NUM_PATCHES))  # (1, 512)
    b2_blk = jnp.tile(params['b2'].astype(jnp.float32), (1, NUM_PATCHES))  # (1, 512)

    # fuse the 3 heads, pad to 128 lanes, fold the mean pool (1/P) into a stacked copy per patch
    wc = jnp.concatenate([params['wt'], params['ws'], params['wi']], axis=1)   # (32, 15)
    bc = jnp.concatenate([params['bt'], params['bs'], params['bi']], axis=1)   # (1, 15)
    pad = HEAD_PAD - NUM_HEAD_OUT
    wc = jnp.pad(wc, ((0, 0), (0, pad)))
    bc = jnp.pad(bc, ((0, 0), (0, pad)))
    wc_blk = jnp.tile(wc / NUM_PATCHES, (NUM_PATCHES, 1)).astype(jnp.bfloat16)  # (512, 128)
    bc = bc.astype(jnp.float32)                                                  # (1, 128)
    return w1_blk, b1_blk, w2_blk, b2_blk, wc_blk, bc


def _choose_tile(n):
    """Batch tile: sublane-aligned near-divisor of the padded batch, >= 2 grid steps
    when the batch is big enough (so both v7x TensorCores get work), capped at TN_MAX."""
    n8 = _round_up(n, 8)
    steps = max(_cdiv(n8, TN_MAX), MIN_GRID_STEPS if n8 >= 2 * 8 else 1)
    tn = _round_up(_cdiv(n8, steps), 8)
    n_pad = _round_up(n8, tn)
    return tn, n_pad


@jax.jit
def stocknet_forward(x_nchw, params):
    """x_nchw: (N, 1, H, W) float32.  Returns (trend, stock, industry) logits."""
    n, c, h, w = x_nchw.shape
    assert c == IN_CHANS and h % PATCH == 0 and w % PATCH == 0

    # glue: NCHW -> (N, 256) packed patches, bf16 to halve input HBM traffic
    packed = _extract_patches_packed(x_nchw).astype(jnp.bfloat16)

    tn, n_pad = _choose_tile(n)
    if n_pad > n:
        packed = jnp.pad(packed, ((0, n_pad - n), (0, 0)))
    grid = (n_pad // tn,)

    w1b, b1b, w2b, b2b, wcb, bcb = _prep_weights(params)

    # Per-step VMEM (tn=1024): x 2x0.5 MiB + weights ~0.9 MiB + out 2x0.5 MiB
    # + intermediates ~3 MiB  =>  < 6 MiB: fits the 16 MiB v5e default scoped
    # VMEM and leaves ample headroom on v6e/v7x; no vmem_limit override needed.
    in_specs = [
        pl.BlockSpec((tn, PACKED_K), lambda i: (i, 0)),                 # packed patches tile
        pl.BlockSpec((PACKED_K, PACKED_F), lambda i: (0, 0)),           # w1 block-diag (resident)
        pl.BlockSpec((1, PACKED_F), lambda i: (0, 0)),                  # b1 tiled
        pl.BlockSpec((PACKED_F, PACKED_F), lambda i: (0, 0)),           # w2 block-diag
        pl.BlockSpec((1, PACKED_F), lambda i: (0, 0)),                  # b2 tiled
        pl.BlockSpec((PACKED_F, HEAD_PAD), lambda i: (0, 0)),           # fused head W (pool folded)
        pl.BlockSpec((1, HEAD_PAD), lambda i: (0, 0)),                  # fused head b
    ]
    out_specs = pl.BlockSpec((tn, HEAD_PAD), lambda i: (i, 0))

    flops = 2 * n_pad * (PACKED_K * PACKED_F
                         + PACKED_F * PACKED_F
                         + PACKED_F * HEAD_PAD)
    bytes_accessed = (packed.size * 2
                      + (w1b.size + w2b.size + wcb.size) * 2
                      + (b1b.size + b2b.size + bcb.size) * 4
                      + n_pad * HEAD_PAD * 4)

    logits = pl.pallas_call(
        stocknet_kernel,
        out_shape=jax.ShapeDtypeStruct((n_pad, HEAD_PAD), jnp.float32),
        grid=grid,
        in_specs=in_specs,
        out_specs=out_specs,
        compiler_params=pltpu.CompilerParams(
            dimension_semantics=("parallel",)),
        cost_estimate=pl.CostEstimate(flops=flops, transcendentals=0,
                                      bytes_accessed=bytes_accessed),
    )(packed, w1b, b1b, w2b, b2b, wcb, bcb)

    trend = logits[:n, 0:TREND_CLASSES]
    stock = logits[:n, TREND_CLASSES:TREND_CLASSES + STOCK_CLASSES]
    industry = logits[:n, TREND_CLASSES + STOCK_CLASSES:NUM_HEAD_OUT]
    return trend, stock, industry


# --------------------------- pure-JAX reference -------------------------------
def stocknet_reference(x_nchw, params):
    n = x_nchw.shape[0]
    x = _extract_patches_rows(x_nchw)                                # (N*P, K) f32
    h = jnp.maximum(x @ params['w1'] + params['b1'], 0.0)
    h = jnp.maximum(h @ params['w2'] + params['b2'], 0.0)
    feat = jnp.mean(h.reshape(n, NUM_PATCHES, NUM_FEATURES), axis=1)
    return (feat @ params['wt'] + params['bt'],
            feat @ params['ws'] + params['bs'],
            feat @ params['wi'] + params['bi'])


# --------------------------- parameter construction --------------------------
def make_params(key):
    """Deterministic Kaiming-normal-like init (matches weights_init intent)."""
    ks = jax.random.split(key, 5)

    def kaiming(k, shape, fan_out):
        # kaiming_normal_(mode='fan_out', nonlinearity='leaky_relu', a=0.01)
        gain = (2.0 / (1.0 + 0.01 ** 2)) ** 0.5
        std = gain / (fan_out ** 0.5)
        return std * jax.random.normal(k, shape, dtype=jnp.float32)

    return {
        # backbone stand-in (conv weights in matmul form)
        'w1': kaiming(ks[0], (PATCH_K, NUM_FEATURES),
                      fan_out=NUM_FEATURES * PATCH * PATCH),
        'b1': jnp.zeros((1, NUM_FEATURES), jnp.float32),
        'w2': kaiming(ks[1], (NUM_FEATURES, NUM_FEATURES), fan_out=NUM_FEATURES),
        'b2': jnp.zeros((1, NUM_FEATURES), jnp.float32),
        # classifier heads
        'wt': kaiming(ks[2], (NUM_FEATURES, TREND_CLASSES), fan_out=TREND_CLASSES),
        'bt': jnp.zeros((1, TREND_CLASSES), jnp.float32),
        'ws': kaiming(ks[3], (NUM_FEATURES, STOCK_CLASSES), fan_out=STOCK_CLASSES),
        'bs': jnp.zeros((1, STOCK_CLASSES), jnp.float32),
        'wi': kaiming(ks[4], (NUM_FEATURES, INDUSTRY_CLASSES),
                      fan_out=INDUSTRY_CLASSES),
        'bi': jnp.zeros((1, INDUSTRY_CLASSES), jnp.float32),
    }


if __name__ == "__main__":
    key = jax.random.PRNGKey(0)
    k_x, k_p = jax.random.split(key)

    # PyTorch-style NCHW input, in_chans=1
    x = jax.random.normal(k_x, (2, IN_CHANS, IMG_HW, IMG_HW), dtype=jnp.float32)
    params = make_params(k_p)

    trend, stock, industry = stocknet_forward(x, params)
    jax.block_until_ready((trend, stock, industry))

    assert trend.shape == (2, TREND_CLASSES)
    assert stock.shape == (2, STOCK_CLASSES)
    assert industry.shape == (2, INDUSTRY_CLASSES)

    # correctness vs. f32 pure-JAX reference (loose tol: bf16 matmul inputs)
    rt, rs, ri = stocknet_reference(x, params)
    for got, ref in ((trend, rt), (stock, rs), (industry, ri)):
        assert jnp.allclose(got, ref, atol=3e-2, rtol=3e-2), (
            float(jnp.max(jnp.abs(got - ref))))

    print("KERNEL_OK")
</pallas_src>

<mosaic_0001>
module attributes {stable_mosaic.version = 11 : i64} {
  func.func @stocknet_kernel(%arg0: i32, %arg1: memref<8x256xbf16, #tpu.memory_space<vmem>>, %arg2: memref<256x512xbf16, #tpu.memory_space<vmem>>, %arg3: memref<1x512xf32, #tpu.memory_space<vmem>>, %arg4: memref<512x512xbf16, #tpu.memory_space<vmem>>, %arg5: memref<1x512xf32, #tpu.memory_space<vmem>>, %arg6: memref<512x128xbf16, #tpu.memory_space<vmem>>, %arg7: memref<1x128xf32, #tpu.memory_space<vmem>>, %arg8: memref<8x128xf32, #tpu.memory_space<vmem>>) attributes {dimension_semantics = [#tpu.dimension_semantics<parallel>], iteration_bounds = array<i64: 1>, scalar_prefetch = 0 : i64, scratch_operands = 0 : i64, tpu.core_type = #tpu.core_type<tc>, window_params = [{transform_indices = @transform_0, window_bounds = array<i64: 8, 256>}, {pipeline_mode = #tpu.pipeline_mode<synchronous>, transform_indices = @transform_1, window_bounds = array<i64: 256, 512>}, {pipeline_mode = #tpu.pipeline_mode<synchronous>, transform_indices = @transform_2, window_bounds = array<i64: 1, 512>}, {pipeline_mode = #tpu.pipeline_mode<synchronous>, transform_indices = @transform_3, window_bounds = array<i64: 512, 512>}, {pipeline_mode = #tpu.pipeline_mode<synchronous>, transform_indices = @transform_4, window_bounds = array<i64: 1, 512>}, {pipeline_mode = #tpu.pipeline_mode<synchronous>, transform_indices = @transform_5, window_bounds = array<i64: 512, 128>}, {pipeline_mode = #tpu.pipeline_mode<synchronous>, transform_indices = @transform_6, window_bounds = array<i64: 1, 128>}, {transform_indices = @transform_7, window_bounds = array<i64: 8, 128>}]} {
    %c0 = arith.constant 0 : index
    %c0_0 = arith.constant 0 : index
    %0 = vector.load %arg1[%c0, %c0_0] : memref<8x256xbf16, #tpu.memory_space<vmem>>, vector<8x256xbf16>
    %c0_1 = arith.constant 0 : index
    %c0_2 = arith.constant 0 : index
    %1 = vector.load %arg2[%c0_1, %c0_2] : memref<256x512xbf16, #tpu.memory_space<vmem>>, vector<256x512xbf16>
    %cst = arith.constant dense<0.000000e+00> : vector<8x512xf32>
    %2 = tpu.matmul %0, %1, %cst {dimension_numbers = #tpu.dot_dimension_numbers<[1], [0], [0], [1], [0, 0, 1, 1], [], []>} : vector<8x256xbf16>, vector<256x512xbf16>, vector<8x512xf32> -> vector<8x512xf32>
    %c0_3 = arith.constant 0 : index
    %c0_4 = arith.constant 0 : index
    %3 = vector.load %arg3[%c0_3, %c0_4] : memref<1x512xf32, #tpu.memory_space<vmem>>, vector<1x512xf32>
    %4 = vector.broadcast %3 : vector<1x512xf32> to vector<8x512xf32>
    %5 = arith.addf %2, %4 : vector<8x512xf32>
    %cst_5 = arith.constant 0.000000e+00 : f32
    %6 = vector.broadcast %cst_5 : f32 to vector<8x512xf32>
    %7 = arith.maximumf %5, %6 : vector<8x512xf32>
    %8 = arith.truncf %7 : vector<8x512xf32> to vector<8x512xbf16>
    %c0_6 = arith.constant 0 : index
    %c0_7 = arith.constant 0 : index
    %9 = vector.load %arg4[%c0_6, %c0_7] : memref<512x512xbf16, #tpu.memory_space<vmem>>, vector<512x512xbf16>
    %cst_8 = arith.constant dense<0.000000e+00> : vector<8x512xf32>
    %10 = tpu.matmul %8, %9, %cst_8 {dimension_numbers = #tpu.dot_dimension_numbers<[1], [0], [0], [1], [0, 0, 1, 1], [], []>} : vector<8x512xbf16>, vector<512x512xbf16>, vector<8x512xf32> -> vector<8x512xf32>
    %c0_9 = arith.constant 0 : index
    %c0_10 = arith.constant 0 : index
    %11 = vector.load %arg5[%c0_9, %c0_10] : memref<1x512xf32, #tpu.memory_space<vmem>>, vector<1x512xf32>
    %12 = vector.broadcast %11 : vector<1x512xf32> to vector<8x512xf32>
    %13 = arith.addf %10, %12 : vector<8x512xf32>
    %cst_11 = arith.constant 0.000000e+00 : f32
    %14 = vector.broadcast %cst_11 : f32 to vector<8x512xf32>
    %15 = arith.maximumf %13, %14 : vector<8x512xf32>
    %16 = arith.truncf %15 : vector<8x512xf32> to vector<8x512xbf16>
    %c0_12 = arith.constant 0 : index
    %c0_13 = arith.constant 0 : index
    %17 = vector.load %arg6[%c0_12, %c0_13] : memref<512x128xbf16, #tpu.memory_space<vmem>>, vector<512x128xbf16>
    %cst_14 = arith.constant dense<0.000000e+00> : vector<8x128xf32>
    %18 = tpu.matmul %16, %17, %cst_14 {dimension_numbers = #tpu.dot_dimension_numbers<[1], [0], [0], [1], [0, 0, 1, 1], [], []>} : vector<8x512xbf16>, vector<512x128xbf16>, vector<8x128xf32> -> vector<8x128xf32>
    %c0_15 = arith.constant 0 : index
    %c0_16 = arith.constant 0 : index
    %19 = vector.load %arg7[%c0_15, %c0_16] : memref<1x128xf32, #tpu.memory_space<vmem>>, vector<1x128xf32>
    %20 = vector.broadcast %19 : vector<1x128xf32> to vector<8x128xf32>
    %21 = arith.addf %18, %20 : vector<8x128xf32>
    %c0_17 = arith.constant 0 : index
    %c0_18 = arith.constant 0 : index
    %22 = vector.load %arg8[%c0_17, %c0_18] : memref<8x128xf32, #tpu.memory_space<vmem>>, vector<8x128xf32>
    tpu.vector_store %arg8[%c0_17, %c0_18], %21 {strides = array<i32>} : memref<8x128xf32, #tpu.memory_space<vmem>>, vector<8x128xf32>,
    return
  }
  func.func @transform_0(%arg0: i32) -> (i32, i32) {
    %c0_i32 = arith.constant 0 : i32
    %c0_i32_0 = arith.constant 0 : i32
    return %arg0, %c0_i32 : i32, i32
  }
  func.func @transform_1(%arg0: i32) -> (i32, i32) {
    %c0_i32 = arith.constant 0 : i32
    %c0_i32_0 = arith.constant 0 : i32
    %c0_i32_1 = arith.constant 0 : i32
    return %c0_i32, %c0_i32_0 : i32, i32
  }
  func.func @transform_2(%arg0: i32) -> (i32, i32) {
    %c0_i32 = arith.constant 0 : i32
    %c0_i32_0 = arith.constant 0 : i32
    %c0_i32_1 = arith.constant 0 : i32
    return %c0_i32, %c0_i32_0 : i32, i32
  }
  func.func @transform_3(%arg0: i32) -> (i32, i32) {
    %c0_i32 = arith.constant 0 : i32
    %c0_i32_0 = arith.constant 0 : i32
    %c0_i32_1 = arith.constant 0 : i32
    return %c0_i32, %c0_i32_0 : i32, i32
  }
  func.func @transform_4(%arg0: i32) -> (i32, i32) {
    %c0_i32 = arith.constant 0 : i32
    %c0_i32_0 = arith.constant 0 : i32
    %c0_i32_1 = arith.constant 0 : i32
    return %c0_i32, %c0_i32_0 : i32, i32
  }
  func.func @transform_5(%arg0: i32) -> (i32, i32) {
    %c0_i32 = arith.constant 0 : i32
    %c0_i32_0 = arith.constant 0 : i32
    %c0_i32_1 = arith.constant 0 : i32
    return %c0_i32, %c0_i32_0 : i32, i32
  }
  func.func @transform_6(%arg0: i32) -> (i32, i32) {
    %c0_i32 = arith.constant 0 : i32
    %c0_i32_0 = arith.constant 0 : i32
    %c0_i32_1 = arith.constant 0 : i32
    return %c0_i32, %c0_i32_0 : i32, i32
  }
  func.func @transform_7(%arg0: i32) -> (i32, i32) {
    %c0_i32 = arith.constant 0 : i32
    %c0_i32_0 = arith.constant 0 : i32
    return %arg0, %c0_i32 : i32, i32
  }
}

</mosaic_0001>

<llo_original>
// kernel: stocknet_forward.1
$region0: #{stocknet_forward.1}
  #allocation0 [shape = 'u32[]', space=smem, size = 0x4, offset = 0x4, fixed_abs, tag = 'smem constant byte address 0x4 - core index']
  #allocation1 [shape = 'u32[144,128]{1,0:T(1,128)}', space=vmem, size = 0x12000, scoped, tag = 'internal scratch']
  %s0 = inlined_call_operand.vmem [shape: bf16[8,256], index: 0, kind: input, shape index: {}]
  %s1 = inlined_call_operand.vmem [shape: bf16[256,512], index: 1, kind: input, shape index: {}]
  %s2 = inlined_call_operand.vmem [shape: f32[1,512], index: 2, kind: input, shape index: {}]
  %s3 = inlined_call_operand.vmem [shape: bf16[512,512], index: 3, kind: input, shape index: {}]
  %s4 = inlined_call_operand.vmem [shape: f32[1,512], index: 4, kind: input, shape index: {}]
  %s5 = inlined_call_operand.vmem [shape: bf16[512,128], index: 5, kind: input, shape index: {}]
  %s6 = inlined_call_operand.vmem [shape: f32[1,128], index: 6, kind: input, shape index: {}]
  %s7 = inlined_call_operand.vmem [shape: f32[8,128], index: 7, kind: output, shape index: {}]
  %s8 = sld [smem:[#allocation0]]
  $region38: #{stocknet_forward.1} parent=0
    _
  %s10 = ssub.s32 1, %s8
  %s11 = scalar_select 0, %s10, %s8
  // Predicated region
  $region2: #{stocknet_forward.1} parent=0 // pred_check
    _
  $region3: #{stocknet_forward.1} parent=0 // pred_check_branch
    %13 = sbr.rel (0) target = $region5
  $region4: #{stocknet_forward.1} parent=0 // pred_region
    _
  $region5: #{stocknet_forward.1} parent=0 // pred_fallthru
    _
  // Predicated region
  $region6: #{stocknet_forward.1} parent=0 // pred_check
    _
  $region7: #{stocknet_forward.1} parent=0 // pred_check_branch
    %15 = sbr.rel (0) target = $region9
  $region8: #{stocknet_forward.1} parent=0 // pred_region
    _
  $region9: #{stocknet_forward.1} parent=0 // pred_fallthru
    _
  // Predicated region
  $region10: #{stocknet_forward.1} parent=0 // pred_check
    _
  $region11: #{stocknet_forward.1} parent=0 // pred_check_branch
    %17 = sbr.rel (0) target = $region13
  $region12: #{stocknet_forward.1} parent=0 // pred_region
    _
  $region13: #{stocknet_forward.1} parent=0 // pred_fallthru
    _
  // Predicated region
  $region14: #{stocknet_forward.1} parent=0 // pred_check
    _
  $region15: #{stocknet_forward.1} parent=0 // pred_check_branch
    %19 = sbr.rel (0) target = $region17
  $region16: #{stocknet_forward.1} parent=0 // pred_region
    _
  $region17: #{stocknet_forward.1} parent=0 // pred_fallthru
    _
  // Predicated region
  $region18: #{stocknet_forward.1} parent=0 // pred_check
    _
  $region19: #{stocknet_forward.1} parent=0 // pred_check_branch
    %21 = sbr.rel (0) target = $region21
  $region20: #{stocknet_forward.1} parent=0 // pred_region
    _
  $region21: #{stocknet_forward.1} parent=0 // pred_fallthru
    _
  // Predicated region
  $region22: #{stocknet_forward.1} parent=0 // pred_check
    _
  $region23: #{stocknet_forward.1} parent=0 // pred_check_branch
    %23 = sbr.rel (0) target = $region25
  $region24: #{stocknet_forward.1} parent=0 // pred_region
    _
  $region25: #{stocknet_forward.1} parent=0 // pred_fallthru
    _
  // Predicated region
  $region26: #{stocknet_forward.1} parent=0 // pred_check
    _
  $region27: #{stocknet_forward.1} parent=0 // pred_check_branch
    %25 = sbr.rel (0) target = $region29
  $region28: #{stocknet_forward.1} parent=0 // pred_region
    _
  $region29: #{stocknet_forward.1} parent=0 // pred_fallthru
    _
  %v27 = vld [vmem:[%s0] sm:$0xff]
  %v28 = vld [vmem:[%s1] sm:$0xff]
  %v29 = vld [vmem:[%s1 + $0x8] sm:$0xff]
  %v30 = vld [vmem:[%s1 + $0x10] sm:$0xff]
  %v31 = vld [vmem:[%s1 + $0x18] sm:$0xff]
  %v32 = vld [vmem:[%s1 + $0x20] sm:$0xff]
  %v33 = vld [vmem:[%s1 + $0x28] sm:$0xff]
  %v34 = vld [vmem:[%s1 + $0x30] sm:$0xff]
  %v35 = vld [vmem:[%s1 + $0x38] sm:$0xff]
  %v36 = vld [vmem:[%s1 + $0x40] sm:$0xff]
  %v37 = vld [vmem:[%s1 + $0x48] sm:$0xff]
  %v38 = vld [vmem:[%s1 + $0x50] sm:$0xff]
  %v39 = vld [vmem:[%s1 + $0x58] sm:$0xff]
  %v40 = vld [vmem:[%s1 + $0x60] sm:$0xff]
  %v41 = vld [vmem:[%s1 + $0x68] sm:$0xff]
  %v42 = vld [vmem:[%s1 + $0x70] sm:$0xff]
  %v43 = vld [vmem:[%s1 + $0x78] sm:$0xff]
  %v44 = vld [vmem:[%s1 + $0x80] sm:$0xff]
  %v45 = vld [vmem:[%s1 + $0x88] sm:$0xff]
  %v46 = vld [vmem:[%s1 + $0x90] sm:$0xff]
  %v47 = vld [vmem:[%s1 + $0x98] sm:$0xff]
  %v48 = vld [vmem:[%s1 + $0xa0] sm:$0xff]
  %v49 = vld [vmem:[%s1 + $0xa8] sm:$0xff]
  %v50 = vld [vmem:[%s1 + $0xb0] sm:$0xff]
  %v51 = vld [vmem:[%s1 + $0xb8] sm:$0xff]
  %v52 = vld [vmem:[%s1 + $0xc0] sm:$0xff]
  %v53 = vld [vmem:[%s1 + $0xc8] sm:$0xff]
  %v54 = vld [vmem:[%s1 + $0xd0] sm:$0xff]
  %v55 = vld [vmem:[%s1 + $0xd8] sm:$0xff]
  %v56 = vld [vmem:[%s1 + $0xe0] sm:$0xff]
  %v57 = vld [vmem:[%s1 + $0xe8] sm:$0xff]
  %v58 = vld [vmem:[%s1 + $0xf0] sm:$0xff]
  %v59 = vld [vmem:[%s1 + $0xf8] sm:$0xff]
  %v60 = vld [vmem:[%s1 + $0x100] sm:$0xff]
  %v61 = vld [vmem:[%s1 + $0x108] sm:$0xff]
  %v62 = vld [vmem:[%s1 + $0x110] sm:$0xff]
  %v63 = vld [vmem:[%s1 + $0x118] sm:$0xff]
  %v64 = vld [vmem:[%s1 + $0x120] sm:$0xff]
  %v65 = vld [vmem:[%s1 + $0x128] sm:$0xff]
  %v66 = vld [vmem:[%s1 + $0x130] sm:$0xff]
  %v67 = vld [vmem:[%s1 + $0x138] sm:$0xff]
  %v68 = vld [vmem:[%s1 + $0x140] sm:$0xff]
  %v69 = vld [vmem:[%s1 + $0x148] sm:$0xff]
  %v70 = vld [vmem:[%s1 + $0x150] sm:$0xff]
  %v71 = vld [vmem:[%s1 + $0x158] sm:$0xff]
  %v72 = vld [vmem:[%s1 + $0x160] sm:$0xff]
  %v73 = vld [vmem:[%s1 + $0x168] sm:$0xff]
  %v74 = vld [vmem:[%s1 + $0x170] sm:$0xff]
  %v75 = vld [vmem:[%s1 + $0x178] sm:$0xff]
  %v76 = vld [vmem:[%s1 + $0x180] sm:$0xff]
  %v77 = vld [vmem:[%s1 + $0x188] sm:$0xff]
  %v78 = vld [vmem:[%s1 + $0x190] sm:$0xff]
  %v79 = vld [vmem:[%s1 + $0x198] sm:$0xff]
  %v80 = vld [vmem:[%s1 + $0x1a0] sm:$0xff]
  %v81 = vld [vmem:[%s1 + $0x1a8] sm:$0xff]
  %v82 = vld [vmem:[%s1 + $0x1b0] sm:$0xff]
  %v83 = vld [vmem:[%s1 + $0x1b8] sm:$0xff]
  %v84 = vld [vmem:[%s1 + $0x1c0] sm:$0xff]
  %v85 = vld [vmem:[%s1 + $0x1c8] sm:$0xff]
  %v86 = vld [vmem:[%s1 + $0x1d0] sm:$0xff]
  %v87 = vld [vmem:[%s1 + $0x1d8] sm:$0xff]
  %v88 = vld [vmem:[%s1 + $0x1e0] sm:$0xff]
  %v89 = vld [vmem:[%s1 + $0x1e8] sm:$0xff]
  %v90 = vld [vmem:[%s1 + $0x1f0] sm:$0xff]
  %v91 = vld [vmem:[%s1 + $0x1f8] sm:$0xff]
  %v92 = vld [vmem:[%s2] sm:$0xf]
  %v94 = vlaneseq
  %v95 = vshrl.u32 %v94, 7
  %v96 = vsub.s32 0, %v95
  %v97 = vrot.slane %v92, %v96
  %v98 = vlaneseq
  %v99 = vshrl.u32 %v98, 7
  %v100 = vsub.s32 1, %v99
  %v101 = vrot.slane %v92, %v100
  %v102 = vlaneseq
  %v103 = vshrl.u32 %v102, 7
  %v104 = vsub.s32 2, %v103
  %v105 = vrot.slane %v92, %v104
  %v106 = vlaneseq
  %v107 = vshrl.u32 %v106, 7
  %v108 = vsub.s32 3, %v107
  %v109 = vrot.slane %v92, %v108
  %v115 = vunpack.c.l.b16 %v27
  %v116 = vunpack.c.h.b16 %v27
  %v117 = vpack.c.b16 %v115, %v115
  %v118 = vpack.c.b16 %v116, %v116
  %v185 = vunpack.c.l.b16 %v28
  %v186 = vunpack.c.h.b16 %v28
  %v187 = vunpack.c.l.b16 %v29
  %v188 = vunpack.c.h.b16 %v29
  %v189 = vunpack.c.l.b16 %v30
  %v190 = vunpack.c.h.b16 %v30
  %v191 = vunpack.c.l.b16 %v31
  %v192 = vunpack.c.h.b16 %v31
  %v193 = vunpack.c.l.b16 %v32
  %v194 = vunpack.c.h.b16 %v32
  %v195 = vunpack.c.l.b16 %v33
  %v196 = vunpack.c.h.b16 %v33
  %v197 = vunpack.c.l.b16 %v34
  %v198 = vunpack.c.h.b16 %v34
  %v199 = vunpack.c.l.b16 %v35
  %v200 = vunpack.c.h.b16 %v35
  %v201 = vunpack.c.l.b16 %v36
  %v202 = vunpack.c.h.b16 %v36
  %v203 = vunpack.c.l.b16 %v37
  %v204 = vunpack.c.h.b16 %v37
  %v205 = vunpack.c.l.b16 %v38
  %v206 = vunpack.c.h.b16 %v38
  %v207 = vunpack.c.l.b16 %v39
  %v208 = vunpack.c.h.b16 %v39
  %v209 = vunpack.c.l.b16 %v40
  %v210 = vunpack.c.h.b16 %v40
  %v211 = vunpack.c.l.b16 %v41
  %v212 = vunpack.c.h.b16 %v41
  %v213 = vunpack.c.l.b16 %v42
  %v214 = vunpack.c.h.b16 %v42
  %v215 = vunpack.c.l.b16 %v43
  %v216 = vunpack.c.h.b16 %v43
  %v217 = vunpack.c.l.b16 %v44
  %v218 = vunpack.c.h.b16 %v44
  %v219 = vunpack.c.l.b16 %v45
  %v220 = vunpack.c.h.b16 %v45
  %v221 = vunpack.c.l.b16 %v46
  %v222 = vunpack.c.h.b16 %v46
  %v223 = vunpack.c.l.b16 %v47
  %v224 = vunpack.c.h.b16 %v47
  %v225 = vunpack.c.l.b16 %v48
  %v226 = vunpack.c.h.b16 %v48
  %v227 = vunpack.c.l.b16 %v49
  %v228 = vunpack.c.h.b16 %v49
  %v229 = vunpack.c.l.b16 %v50
  %v230 = vunpack.c.h.b16 %v50
  %v231 = vunpack.c.l.b16 %v51
  %v232 = vunpack.c.h.b16 %v51
  %v233 = vunpack.c.l.b16 %v52
  %v234 = vunpack.c.h.b16 %v52
  %v235 = vunpack.c.l.b16 %v53
  %v236 = vunpack.c.h.b16 %v53
  %v237 = vunpack.c.l.b16 %v54
  %v238 = vunpack.c.h.b16 %v54
  %v239 = vunpack.c.l.b16 %v55
  %v240 = vunpack.c.h.b16 %v55
  %v241 = vunpack.c.l.b16 %v56
  %v242 = vunpack.c.h.b16 %v56
  %v243 = vunpack.c.l.b16 %v57
  %v244 = vunpack.c.h.b16 %v57
  %v245 = vunpack.c.l.b16 %v58
  %v246 = vunpack.c.h.b16 %v58
  %v247 = vunpack.c.l.b16 %v59
  %v248 = vunpack.c.h.b16 %v59
  %v249 = vunpack.c.l.b16 %v60
  %v250 = vunpack.c.h.b16 %v60
  %v251 = vunpack.c.l.b16 %v61
  %v252 = vunpack.c.h.b16 %v61
  %v253 = vunpack.c.l.b16 %v62
  %v254 = vunpack.c.h.b16 %v62
  %v255 = vunpack.c.l.b16 %v63
  %v256 = vunpack.c.h.b16 %v63
  %v257 = vunpack.c.l.b16 %v64
  %v258 = vunpack.c.h.b16 %v64
  %v259 = vunpack.c.l.b16 %v65
  %v260 = vunpack.c.h.b16 %v65
  %v261 = vunpack.c.l.b16 %v66
  %v262 = vunpack.c.h.b16 %v66
  %v263 = vunpack.c.l.b16 %v67
  %v264 = vunpack.c.h.b16 %v67
  %v265 = vunpack.c.l.b16 %v68
  %v266 = vunpack.c.h.b16 %v68
  %v267 = vunpack.c.l.b16 %v69
  %v268 = vunpack.c.h.b16 %v69
  %v269 = vunpack.c.l.b16 %v70
  %v270 = vunpack.c.h.b16 %v70
  %v271 = vunpack.c.l.b16 %v71
  %v272 = vunpack.c.h.b16 %v71
  %v273 = vunpack.c.l.b16 %v72
  %v274 = vunpack.c.h.b16 %v72
  %v275 = vunpack.c.l.b16 %v73
  %v276 = vunpack.c.h.b16 %v73
  %v277 = vunpack.c.l.b16 %v74
  %v278 = vunpack.c.h.b16 %v74
  %v279 = vunpack.c.l.b16 %v75
  %v280 = vunpack.c.h.b16 %v75
  %v281 = vunpack.c.l.b16 %v76
  %v282 = vunpack.c.h.b16 %v76
  %v283 = vunpack.c.l.b16 %v77
  %v284 = vunpack.c.h.b16 %v77
  %v285 = vunpack.c.l.b16 %v78
  %v286 = vunpack.c.h.b16 %v78
  %v287 = vunpack.c.l.b16 %v79
  %v288 = vunpack.c.h.b16 %v79
  %v289 = vunpack.c.l.b16 %v80
  %v290 = vunpack.c.h.b16 %v80
  %v291 = vunpack.c.l.b16 %v81
  %v292 = vunpack.c.h.b16 %v81
  %v293 = vunpack.c.l.b16 %v82
  %v294 = vunpack.c.h.b16 %v82
  %v295 = vunpack.c.l.b16 %v83
  %v296 = vunpack.c.h.b16 %v83
  %v297 = vunpack.c.l.b16 %v84
  %v298 = vunpack.c.h.b16 %v84
  %v299 = vunpack.c.l.b16 %v85
  %v300 = vunpack.c.h.b16 %v85
  %v301 = vunpack.c.l.b16 %v86
  %v302 = vunpack.c.h.b16 %v86
  %v303 = vunpack.c.l.b16 %v87
  %v304 = vunpack.c.h.b16 %v87
  %v305 = vunpack.c.l.b16 %v88
  %v306 = vunpack.c.h.b16 %v88
  %v307 = vunpack.c.l.b16 %v89
  %v308 = vunpack.c.h.b16 %v89
  %v309 = vunpack.c.l.b16 %v90
  %v310 = vunpack.c.h.b16 %v90
  %v311 = vunpack.c.l.b16 %v91
  %v312 = vunpack.c.h.b16 %v91
  %v313 = vpack.c.b16 %v189, %v185
  %v314 = vpack.c.b16 %v190, %v186
  %v315 = vpack.c.b16 %v191, %v187
  %v316 = vpack.c.b16 %v192, %v188
  %v317 = vpack.c.b16 %v197, %v193
  %v318 = vpack.c.b16 %v198, %v194
  %v319 = vpack.c.b16 %v199, %v195
  %v320 = vpack.c.b16 %v200, %v196
  %v321 = vpack.c.b16 %v205, %v201
  %v322 = vpack.c.b16 %v206, %v202
  %v323 = vpack.c.b16 %v207, %v203
  %v324 = vpack.c.b16 %v208, %v204
  %v325 = vpack.c.b16 %v213, %v209
  %v326 = vpack.c.b16 %v214, %v210
  %v327 = vpack.c.b16 %v215, %v211
  %v328 = vpack.c.b16 %v216, %v212
  %v329 = vpack.c.b16 %v221, %v217
  %v330 = vpack.c.b16 %v222, %v218
  %v331 = vpack.c.b16 %v223, %v219
  %v332 = vpack.c.b16 %v224, %v220
  %v333 = vpack.c.b16 %v229, %v225
  %v334 = vpack.c.b16 %v230, %v226
  %v335 = vpack.c.b16 %v231, %v227
  %v336 = vpack.c.b16 %v232, %v228
  %v337 = vpack.c.b16 %v237, %v233
  %v338 = vpack.c.b16 %v238, %v234
  %v339 = vpack.c.b16 %v239, %v235
  %v340 = vpack.c.b16 %v240, %v236
  %v341 = vpack.c.b16 %v245, %v241
  %v342 = vpack.c.b16 %v246, %v242
  %v343 = vpack.c.b16 %v247, %v243
  %v344 = vpack.c.b16 %v248, %v244
  %v345 = vpack.c.b16 %v253, %v249
  %v346 = vpack.c.b16 %v254, %v250
  %v347 = vpack.c.b16 %v255, %v251
  %v348 = vpack.c.b16 %v256, %v252
  %v349 = vpack.c.b16 %v261, %v257
  %v350 = vpack.c.b16 %v262, %v258
  %v351 = vpack.c.b16 %v263, %v259
  %v352 = vpack.c.b16 %v264, %v260
  %v353 = vpack.c.b16 %v269, %v265
  %v354 = vpack.c.b16 %v270, %v266
  %v355 = vpack.c.b16 %v271, %v267
  %v356 = vpack.c.b16 %v272, %v268
  %v357 = vpack.c.b16 %v277, %v273
  %v358 = vpack.c.b16 %v278, %v274
  %v359 = vpack.c.b16 %v279, %v275
  %v360 = vpack.c.b16 %v280, %v276
  %v361 = vpack.c.b16 %v285, %v281
  %v362 = vpack.c.b16 %v286, %v282
  %v363 = vpack.c.b16 %v287, %v283
  %v364 = vpack.c.b16 %v288, %v284
  %v365 = vpack.c.b16 %v293, %v289
  %v366 = vpack.c.b16 %v294, %v290
  %v367 = vpack.c.b16 %v295, %v291
  %v368 = vpack.c.b16 %v296, %v292
  %v369 = vpack.c.b16 %v301, %v297
  %v370 = vpack.c.b16 %v302, %v298
  %v371 = vpack.c.b16 %v303, %v299
  %v372 = vpack.c.b16 %v304, %v300
  %v373 = vpack.c.b16 %v309, %v305
  %v374 = vpack.c.b16 %v310, %v306
  %v375 = vpack.c.b16 %v311, %v307
  %v376 = vpack.c.b16 %v312, %v308
  %441 = vmatprep.subr.bf16.mxu0 %v314
  %442 = vmatpush1.bf16.msra.mxu0 %v313
  %443 = vmatprep.subr.bf16.mxu0 %v318
  %444 = vmatpush1.bf16.msra.mxu0 %v317
  %445 = vmatprep.subr.bf16.mxu0 %v322
  %446 = vmatpush1.bf16.msra.mxu0 %v321
  %447 = vmatprep.subr.bf16.mxu0 %v326
  %448 = vmatpush1.bf16.msra.mxu0 %v325
  %449 = vmatprep.subr.bf16.mxu0 %v330
  %450 = vmatpush1.bf16.msra.mxu0 %v329
  %451 = vmatprep.subr.bf16.mxu0 %v334
  %452 = vmatpush1.bf16.msra.mxu0 %v333
  %453 = vmatprep.subr.bf16.mxu0 %v338
  %454 = vmatpush1.bf16.msra.mxu0 %v337
  %455 = vmatprep.subr.bf16.mxu0 %v342
  %456 = vmatpush1.bf16.msra.mxu0 %v341
  %457 = vmatprep.subr.bf16.mxu0 %v346
  %458 = vmatpush1.bf16.msra.mxu0 %v345
  %459 = vmatprep.subr.bf16.mxu0 %v350
  %460 = vmatpush1.bf16.msra.mxu0 %v349
  %461 = vmatprep.subr.bf16.mxu0 %v354
  %462 = vmatpush1.bf16.msra.mxu0 %v353
  %463 = vmatprep.subr.bf16.mxu0 %v358
  %464 = vmatpush1.bf16.msra.mxu0 %v357
  %465 = vmatprep.subr.bf16.mxu0 %v362
  %466 = vmatpush1.bf16.msra.mxu0 %v361
  %467 = vmatprep.subr.bf16.mxu0 %v366
  %468 = vmatpush1.bf16.msra.mxu0 %v365
  %469 = vmatprep.subr.bf16.mxu0 %v370
  %470 = vmatpush1.bf16.msra.mxu0 %v369
  %471 = vmatprep.subr.bf16.mxu0 %v374
  %472 = vmatpush1.bf16.msra.mxu0 %v373
  %473 = vmatprep.mubr.bf16.mxu0 %v118
  %474 = vmatmul.mubr.bf16.gmra.mrb[0].mxu0 %v117
  %v475 = vpop.f32.mrb[0].mxu0
  %v476 = vadd.f32 %v97, %v475
  %v477 = vpop.f32.mrb[0].mxu0
  %v478 = vadd.f32 %v101, %v477
  %v479 = vpop.f32.mrb[0].mxu0
  %v480 = vpop.f32.mrb[0].mxu0
  %481 = vdwg.mxu0
  %482 = vmatprep.subr.bf16.mxu0 %v316
  %483 = vmatpush1.bf16.msra.mxu0 %v315
  %484 = vmatprep.subr.bf16.mxu0 %v320
  %485 = vmatpush1.bf16.msra.mxu0 %v319
  %486 = vmatprep.subr.bf16.mxu0 %v324
  %487 = vmatpush1.bf16.msra.mxu0 %v323
  %488 = vmatprep.subr.bf16.mxu0 %v328
  %489 = vmatpush1.bf16.msra.mxu0 %v327
  %490 = vmatprep.subr.bf16.mxu0 %v332
  %491 = vmatpush1.bf16.msra.mxu0 %v331
  %492 = vmatprep.subr.bf16.mxu0 %v336
  %493 = vmatpush1.bf16.msra.mxu0 %v335
  %494 = vmatprep.subr.bf16.mxu0 %v340
  %495 = vmatpush1.bf16.msra.mxu0 %v339
  %496 = vmatprep.subr.bf16.mxu0 %v344
  %497 = vmatpush1.bf16.msra.mxu0 %v343
  %498 = vmatprep.subr.bf16.mxu0 %v348
  %499 = vmatpush1.bf16.msra.mxu0 %v347
  %500 = vmatprep.subr.bf16.mxu0 %v352
  %501 = vmatpush1.bf16.msra.mxu0 %v351
  %502 = vmatprep.subr.bf16.mxu0 %v356
  %503 = vmatpush1.bf16.msra.mxu0 %v355
  %504 = vmatprep.subr.bf16.mxu0 %v360
  %505 = vmatpush1.bf16.msra.mxu0 %v359
  %506 = vmatprep.subr.bf16.mxu0 %v364
  %507 = vmatpush1.bf16.msra.mxu0 %v363
  %508 = vmatprep.subr.bf16.mxu0 %v368
  %509 = vmatpush1.bf16.msra.mxu0 %v367
  %510 = vmatprep.subr.bf16.mxu0 %v372
  %511 = vmatpush1.bf16.msra.mxu0 %v371
  %512 = vmatprep.subr.bf16.mxu0 %v376
  %513 = vmatpush1.bf16.msra.mxu0 %v375
  %514 = vmatprep.mubr.bf16.mxu0 %v118
  %515 = vmatmul.mubr.bf16.gmra.mrb[0].mxu0 %v117
  %v516 = vpop.f32.mrb[0].mxu0
  %v517 = vadd.f32 %v105, %v516
  %v518 = vpop.f32.mrb[0].mxu0
  %v519 = vadd.f32 %v109, %v518
  %v520 = vpop.f32.mrb[0].mxu0
  %v521 = vpop.f32.mrb[0].mxu0
  %522 = vdwg.mxu0
  %v523 = vmax.f32 %v476, 0.0
  %v524 = vmax.f32 %v478, 0.0
  %v525 = vmax.f32 %v517, 0.0
  %v526 = vmax.f32 %v519, 0.0
  %v527 = vpack.c.bf16 %v523, %v523
  %v528 = vpack.c.bf16 %v524, %v524
  %v529 = vpack.c.bf16 %v525, %v525
  %v530 = vpack.c.bf16 %v526, %v526
  %v531 = vld [vmem:[%s3] sm:$0xff]
  %v532 = vld [vmem:[%s3 + $0x8] sm:$0xff]
  %v533 = vld [vmem:[%s3 + $0x10] sm:$0xff]
  %v534 = vld [vmem:[%s3 + $0x18] sm:$0xff]
  %v535 = vld [vmem:[%s3 + $0x20] sm:$0xff]
  %v536 = vld [vmem:[%s3 + $0x28] sm:$0xff]
  %v537 = vld [vmem:[%s3 + $0x30] sm:$0xff]
  %v538 = vld [vmem:[%s3 + $0x38] sm:$0xff]
  %v539 = vld [vmem:[%s3 + $0x40] sm:$0xff]
  %v540 = vld [vmem:[%s3 + $0x48] sm:$0xff]
  %v541 = vld [vmem:[%s3 + $0x50] sm:$0xff]
  %v542 = vld [vmem:[%s3 + $0x58] sm:$0xff]
  %v543 = vld [vmem:[%s3 + $0x60] sm:$0xff]
  %v544 = vld [vmem:[%s3 + $0x68] sm:$0xff]
  %v545 = vld [vmem:[%s3 + $0x70] sm:$0xff]
  %v546 = vld [vmem:[%s3 + $0x78] sm:$0xff]
  %v547 = vld [vmem:[%s3 + $0x80] sm:$0xff]
  %v548 = vld [vmem:[%s3 + $0x88] sm:$0xff]
  %v549 = vld [vmem:[%s3 + $0x90] sm:$0xff]
  %v550 = vld [vmem:[%s3 + $0x98] sm:$0xff]
  %v551 = vld [vmem:[%s3 + $0xa0] sm:$0xff]
  %v552 = vld [vmem:[%s3 + $0xa8] sm:$0xff]
  %v553 = vld [vmem:[%s3 + $0xb0] sm:$0xff]
  %v554 = vld [vmem:[%s3 + $0xb8] sm:$0xff]
  %v555 = vld [vmem:[%s3 + $0xc0] sm:$0xff]
  %v556 = vld [vmem:[%s3 + $0xc8] sm:$0xff]
  %v557 = vld [vmem:[%s3 + $0xd0] sm:$0xff]
  %v558 = vld [vmem:[%s3 + $0xd8] sm:$0xff]
  %v559 = vld [vmem:[%s3 + $0xe0] sm:$0xff]
  %v560 = vld [vmem:[%s3 + $0xe8] sm:$0xff]
  %v561 = vld [vmem:[%s3 + $0xf0] sm:$0xff]
  %v562 = vld [vmem:[%s3 + $0xf8] sm:$0xff]
  %v563 = vld [vmem:[%s3 + $0x100] sm:$0xff]
  %v564 = vld [vmem:[%s3 + $0x108] sm:$0xff]
  %v565 = vld [vmem:[%s3 + $0x110] sm:$0xff]
  %v566 = vld [vmem:[%s3 + $0x118] sm:$0xff]
  %v567 = vld [vmem:[%s3 + $0x120] sm:$0xff]
  %v568 = vld [vmem:[%s3 + $0x128] sm:$0xff]
  %v569 = vld [vmem:[%s3 + $0x130] sm:$0xff]
  %v570 = vld [vmem:[%s3 + $0x138] sm:$0xff]
  %v571 = vld [vmem:[%s3 + $0x140] sm:$0xff]
  %v572 = vld [vmem:[%s3 + $0x148] sm:$0xff]
  %v573 = vld [vmem:[%s3 + $0x150] sm:$0xff]
  %v574 = vld [vmem:[%s3 + $0x158] sm:$0xff]
  %v575 = vld [vmem:[%s3 + $0x160] sm:$0xff]
  %v576 = vld [vmem:[%s3 + $0x168] sm:$0xff]
  %v577 = vld [vmem:[%s3 + $0x170] sm:$0xff]
  %v578 = vld [vmem:[%s3 + $0x178] sm:$0xff]
  %v579 = vld [vmem:[%s3 + $0x180] sm:$0xff]
  %v580 = vld [vmem:[%s3 + $0x188] sm:$0xff]
  %v581 = vld [vmem:[%s3 + $0x190] sm:$0xff]
  %v582 = vld [vmem:[%s3 + $0x198] sm:$0xff]
  %v583 = vld [vmem:[%s3 + $0x1a0] sm:$0xff]
  %v584 = vld [vmem:[%s3 + $0x1a8] sm:$0xff]
  %v585 = vld [vmem:[%s3 + $0x1b0] sm:$0xff]
  %v586 = vld [vmem:[%s3 + $0x1b8] sm:$0xff]
  %v587 = vld [vmem:[%s3 + $0x1c0] sm:$0xff]
  %v588 = vld [vmem:[%s3 + $0x1c8] sm:$0xff]
  %v589 = vld [vmem:[%s3 + $0x1d0] sm:$0xff]
  %v590 = vld [vmem:[%s3 + $0x1d8] sm:$0xff]
  %v591 = vld [vmem:[%s3 + $0x1e0] sm:$0xff]
  %v592 = vld [vmem:[%s3 + $0x1e8] sm:$0xff]
  %v593 = vld [vmem:[%s3 + $0x1f0] sm:$0xff]
  %v594 = vld [vmem:[%s3 + $0x1f8] sm:$0xff]
  %v595 = vld [vmem:[%s3 + $0x200] sm:$0xff]
  %v596 = vld [vmem:[%s3 + $0x208] sm:$0xff]
  %v597 = vld [vmem:[%s3 + $0x210] sm:$0xff]
  %v598 = vld [vmem:[%s3 + $0x218] sm:$0xff]
  %v599 = vld [vmem:[%s3 + $0x220] sm:$0xff]
  %v600 = vld [vmem:[%s3 + $0x228] sm:$0xff]
  %v601 = vld [vmem:[%s3 + $0x230] sm:$0xff]
  %v602 = vld [vmem:[%s3 + $0x238] sm:$0xff]
  %v603 = vld [vmem:[%s3 + $0x240] sm:$0xff]
  %v604 = vld [vmem:[%s3 + $0x248] sm:$0xff]
  %v605 = vld [vmem:[%s3 + $0x250] sm:$0xff]
  %v606 = vld [vmem:[%s3 + $0x258] sm:$0xff]
  %v607 = vld [vmem:[%s3 + $0x260] sm:$0xff]
  %v608 = vld [vmem:[%s3 + $0x268] sm:$0xff]
  %v609 = vld [vmem:[%s3 + $0x270] sm:$0xff]
  %v610 = vld [vmem:[%s3 + $0x278] sm:$0xff]
  %v611 = vld [vmem:[%s3 + $0x280] sm:$0xff]
  %v612 = vld [vmem:[%s3 + $0x288] sm:$0xff]
  %v613 = vld [vmem:[%s3 + $0x290] sm:$0xff]
  %v614 = vld [vmem:[%s3 + $0x298] sm:$0xff]
  %v615 = vld [vmem:[%s3 + $0x2a0] sm:$0xff]
  %v616 = vld [vmem:[%s3 + $0x2a8] sm:$0xff]
  %v617 = vld [vmem:[%s3 + $0x2b0] sm:$0xff]
  %v618 = vld [vmem:[%s3 + $0x2b8] sm:$0xff]
  %v619 = vld [vmem:[%s3 + $0x2c0] sm:$0xff]
  %v620 = vld [vmem:[%s3 + $0x2c8] sm:$0xff]
  %v621 = vld [vmem:[%s3 + $0x2d0] sm:$0xff]
  %v622 = vld [vmem:[%s3 + $0x2d8] sm:$0xff]
  %v623 = vld [vmem:[%s3 + $0x2e0] sm:$0xff]
  %v624 = vld [vmem:[%s3 + $0x2e8] sm:$0xff]
  %v625 = vld [vmem:[%s3 + $0x2f0] sm:$0xff]
  %v626 = vld [vmem:[%s3 + $0x2f8] sm:$0xff]
  %v627 = vld [vmem:[%s3 + $0x300] sm:$0xff]
  %v628 = vld [vmem:[%s3 + $0x308] sm:$0xff]
  %v629 = vld [vmem:[%s3 + $0x310] sm:$0xff]
  %v630 = vld [vmem:[%s3 + $0x318] sm:$0xff]
  %v631 = vld [vmem:[%s3 + $0x320] sm:$0xff]
  %v632 = vld [vmem:[%s3 + $0x328] sm:$0xff]
  %v633 = vld [vmem:[%s3 + $0x330] sm:$0xff]
  %v634 = vld [vmem:[%s3 + $0x338] sm:$0xff]
  %v635 = vld [vmem:[%s3 + $0x340] sm:$0xff]
  %v636 = vld [vmem:[%s3 + $0x348] sm:$0xff]
  %v637 = vld [vmem:[%s3 + $0x350] sm:$0xff]
  %v638 = vld [vmem:[%s3 + $0x358] sm:$0xff]
  %v639 = vld [vmem:[%s3 + $0x360] sm:$0xff]
  %v640 = vld [vmem:[%s3 + $0x368] sm:$0xff]
  %v641 = vld [vmem:[%s3 + $0x370] sm:$0xff]
  %v642 = vld [vmem:[%s3 + $0x378] sm:$0xff]
  %v643 = vld [vmem:[%s3 + $0x380] sm:$0xff]
  %v644 = vld [vmem:[%s3 + $0x388] sm:$0xff]
  %v645 = vld [vmem:[%s3 + $0x390] sm:$0xff]
  %v646 = vld [vmem:[%s3 + $0x398] sm:$0xff]
  %v647 = vld [vmem:[%s3 + $0x3a0] sm:$0xff]
  %v648 = vld [vmem:[%s3 + $0x3a8] sm:$0xff]
  %v649 = vld [vmem:[%s3 + $0x3b0] sm:$0xff]
  %v650 = vld [vmem:[%s3 + $0x3b8] sm:$0xff]
  %v651 = vld [vmem:[%s3 + $0x3c0] sm:$0xff]
  %v652 = vld [vmem:[%s3 + $0x3c8] sm:$0xff]
  %v653 = vld [vmem:[%s3 + $0x3d0] sm:$0xff]
  %v654 = vld [vmem:[%s3 + $0x3d8] sm:$0xff]
  %v655 = vld [vmem:[%s3 + $0x3e0] sm:$0xff]
  %v656 = vld [vmem:[%s3 + $0x3e8] sm:$0xff]
  %v657 = vld [vmem:[%s3 + $0x3f0] sm:$0xff]
  %v658 = vld [vmem:[%s3 + $0x3f8] sm:$0xff]
  %v659 = vld [vmem:[%s4] sm:$0xf]
  %v661 = vlaneseq
  %v662 = vshrl.u32 %v661, 7
  %v663 = vsub.s32 0, %v662
  %v664 = vrot.slane %v659, %v663
  %v665 = vlaneseq
  %v666 = vshrl.u32 %v665, 7
  %v667 = vsub.s32 1, %v666
  %v668 = vrot.slane %v659, %v667
  %v669 = vlaneseq
  %v670 = vshrl.u32 %v669, 7
  %v671 = vsub.s32 2, %v670
  %v672 = vrot.slane %v659, %v671
  %v673 = vlaneseq
  %v674 = vshrl.u32 %v673, 7
  %v675 = vsub.s32 3, %v674
  %v676 = vrot.slane %v659, %v675
  %v809 = vunpack.c.l.b16 %v531
  %v810 = vunpack.c.h.b16 %v531
  %v811 = vunpack.c.l.b16 %v532
  %v812 = vunpack.c.h.b16 %v532
  %v813 = vunpack.c.l.b16 %v533
  %v814 = vunpack.c.h.b16 %v533
  %v815 = vunpack.c.l.b16 %v534
  %v816 = vunpack.c.h.b16 %v534
  %v817 = vunpack.c.l.b16 %v535
  %v818 = vunpack.c.h.b16 %v535
  %v819 = vunpack.c.l.b16 %v536
  %v820 = vunpack.c.h.b16 %v536
  %v821 = vunpack.c.l.b16 %v537
  %v822 = vunpack.c.h.b16 %v537
  %v823 = vunpack.c.l.b16 %v538
  %v824 = vunpack.c.h.b16 %v538
  %v825 = vunpack.c.l.b16 %v539
  %v826 = vunpack.c.h.b16 %v539
  %v827 = vunpack.c.l.b16 %v540
  %v828 = vunpack.c.h.b16 %v540
  %v829 = vunpack.c.l.b16 %v541
  %v830 = vunpack.c.h.b16 %v541
  %v831 = vunpack.c.l.b16 %v542
  %v832 = vunpack.c.h.b16 %v542
  %v833 = vunpack.c.l.b16 %v543
  %v834 = vunpack.c.h.b16 %v543
  %v835 = vunpack.c.l.b16 %v544
  %v836 = vunpack.c.h.b16 %v544
  %v837 = vunpack.c.l.b16 %v545
  %v838 = vunpack.c.h.b16 %v545
  %v839 = vunpack.c.l.b16 %v546
  %v840 = vunpack.c.h.b16 %v546
  %v841 = vunpack.c.l.b16 %v547
  %v842 = vunpack.c.h.b16 %v547
  %v843 = vunpack.c.l.b16 %v548
  %v844 = vunpack.c.h.b16 %v548
  %v845 = vunpack.c.l.b16 %v549
  %v846 = vunpack.c.h.b16 %v549
  %v847 = vunpack.c.l.b16 %v550
  %v848 = vunpack.c.h.b16 %v550
  %v849 = vunpack.c.l.b16 %v551
  %v850 = vunpack.c.h.b16 %v551
  %v851 = vunpack.c.l.b16 %v552
  %v852 = vunpack.c.h.b16 %v552
  %v853 = vunpack.c.l.b16 %v553
  %v854 = vunpack.c.h.b16 %v553
  %v855 = vunpack.c.l.b16 %v554
  %v856 = vunpack.c.h.b16 %v554
  %v857 = vunpack.c.l.b16 %v555
  %v858 = vunpack.c.h.b16 %v555
  %v859 = vunpack.c.l.b16 %v556
  %v860 = vunpack.c.h.b16 %v556
  %v861 = vunpack.c.l.b16 %v557
  %v862 = vunpack.c.h.b16 %v557
  %v863 = vunpack.c.l.b16 %v558
  %v864 = vunpack.c.h.b16 %v558
  %v865 = vunpack.c.l.b16 %v559
  %v866 = vunpack.c.h.b16 %v559
  %v867 = vunpack.c.l.b16 %v560
  %v868 = vunpack.c.h.b16 %v560
  %v869 = vunpack.c.l.b16 %v561
  %v870 = vunpack.c.h.b16 %v561
  %v871 = vunpack.c.l.b16 %v562
  %v872 = vunpack.c.h.b16 %v562
  %v873 = vunpack.c.l.b16 %v563
  %v874 = vunpack.c.h.b16 %v563
  %v875 = vunpack.c.l.b16 %v564
  %v876 = vunpack.c.h.b16 %v564
  %v877 = vunpack.c.l.b16 %v565
  %v878 = vunpack.c.h.b16 %v565
  %v879 = vunpack.c.l.b16 %v566
  %v880 = vunpack.c.h.b16 %v566
  %v881 = vunpack.c.l.b16 %v567
  %v882 = vunpack.c.h.b16 %v567
  %v883 = vunpack.c.l.b16 %v568
  %v884 = vunpack.c.h.b16 %v568
  %v885 = vunpack.c.l.b16 %v569
  %v886 = vunpack.c.h.b16 %v569
  %v887 = vunpack.c.l.b16 %v570
  %v888 = vunpack.c.h.b16 %v570
  %v889 = vunpack.c.l.b16 %v571
  %v890 = vunpack.c.h.b16 %v571
  %v891 = vunpack.c.l.b16 %v572
  %v892 = vunpack.c.h.b16 %v572
  %v893 = vunpack.c.l.b16 %v573
  %v894 = vunpack.c.h.b16 %v573
  %v895 = vunpack.c.l.b16 %v574
  %v896 = vunpack.c.h.b16 %v574
  %v897 = vunpack.c.l.b16 %v575
  %v898 = vunpack.c.h.b16 %v575
  %v899 = vunpack.c.l.b16 %v576
  %v900 = vunpack.c.h.b16 %v576
  %v901 = vunpack.c.l.b16 %v577
  %v902 = vunpack.c.h.b16 %v577
  %v903 = vunpack.c.l.b16 %v578
  %v904 = vunpack.c.h.b16 %v578
  %v905 = vunpack.c.l.b16 %v579
  %v906 = vunpack.c.h.b16 %v579
  %v907 = vunpack.c.l.b16 %v580
  %v908 = vunpack.c.h.b16 %v580
  %v909 = vunpack.c.l.b16 %v581
  %v910 = vunpack.c.h.b16 %v581
  %v911 = vunpack.c.l.b16 %v582
  %v912 = vunpack.c.h.b16 %v582
  %v913 = vunpack.c.l.b16 %v583
  %v914 = vunpack.c.h.b16 %v583
  %v915 = vunpack.c.l.b16 %v584
  %v916 = vunpack.c.h.b16 %v584
  %v917 = vunpack.c.l.b16 %v585
  %v918 = vunpack.c.h.b16 %v585
  %v919 = vunpack.c.l.b16 %v586
  %v920 = vunpack.c.h.b16 %v586
  %v921 = vunpack.c.l.b16 %v587
  %v922 = vunpack.c.h.b16 %v587
  %v923 = vunpack.c.l.b16 %v588
  %v924 = vunpack.c.h.b16 %v588
  %v925 = vunpack.c.l.b16 %v589
  %v926 = vunpack.c.h.b16 %v589
  %v927 = vunpack.c.l.b16 %v590
  %v928 = vunpack.c.h.b16 %v590
  %v929 = vunpack.c.l.b16 %v591
  %v930 = vunpack.c.h.b16 %v591
  %v931 = vunpack.c.l.b16 %v592
  %v932 = vunpack.c.h.b16 %v592
  %v933 = vunpack.c.l.b16 %v593
  %v934 = vunpack.c.h.b16 %v593
  %v935 = vunpack.c.l.b16 %v594
  %v936 = vunpack.c.h.b16 %v594
  %v937 = vunpack.c.l.b16 %v595
  %v938 = vunpack.c.h.b16 %v595
  %v939 = vunpack.c.l.b16 %v596
  %v940 = vunpack.c.h.b16 %v596
  %v941 = vunpack.c.l.b16 %v597
  %v942 = vunpack.c.h.b16 %v597
  %v943 = vunpack.c.l.b16 %v598
  %v944 = vunpack.c.h.b16 %v598
  %v945 = vunpack.c.l.b16 %v599
  %v946 = vunpack.c.h.b16 %v599
  %v947 = vunpack.c.l.b16 %v600
  %v948 = vunpack.c.h.b16 %v600
  %v949 = vunpack.c.l.b16 %v601
  %v950 = vunpack.c.h.b16 %v601
  %v951 = vunpack.c.l.b16 %v602
  %v952 = vunpack.c.h.b16 %v602
  %v953 = vunpack.c.l.b16 %v603
  %v954 = vunpack.c.h.b16 %v603
  %v955 = vunpack.c.l.b16 %v604
  %v956 = vunpack.c.h.b16 %v604
  %v957 = vunpack.c.l.b16 %v605
  %v958 = vunpack.c.h.b16 %v605
  %v959 = vunpack.c.l.b16 %v606
  %v960 = vunpack.c.h.b16 %v606
  %v961 = vunpack.c.l.b16 %v607
  %v962 = vunpack.c.h.b16 %v607
  %v963 = vunpack.c.l.b16 %v608
  %v964 = vunpack.c.h.b16 %v608
  %v965 = vunpack.c.l.b16 %v609
  %v966 = vunpack.c.h.b16 %v609
  %v967 = vunpack.c.l.b16 %v610
  %v968 = vunpack.c.h.b16 %v610
  %v969 = vunpack.c.l.b16 %v611
  %v970 = vunpack.c.h.b16 %v611
  %v971 = vunpack.c.l.b16 %v612
  %v972 = vunpack.c.h.b16 %v612
  %v973 = vunpack.c.l.b16 %v613
  %v974 = vunpack.c.h.b16 %v613
  %v975 = vunpack.c.l.b16 %v614
  %v976 = vunpack.c.h.b16 %v614
  %v977 = vunpack.c.l.b16 %v615
  %v978 = vunpack.c.h.b16 %v615
  %v979 = vunpack.c.l.b16 %v616
  %v980 = vunpack.c.h.b16 %v616
  %v981 = vunpack.c.l.b16 %v617
  %v982 = vunpack.c.h.b16 %v617
  %v983 = vunpack.c.l.b16 %v618
  %v984 = vunpack.c.h.b16 %v618
  %v985 = vunpack.c.l.b16 %v619
  %v986 = vunpack.c.h.b16 %v619
  %v987 = vunpack.c.l.b16 %v620
  %v988 = vunpack.c.h.b16 %v620
  %v989 = vunpack.c.l.b16 %v621
  %v990 = vunpack.c.h.b16 %v621
  %v991 = vunpack.c.l.b16 %v622
  %v992 = vunpack.c.h.b16 %v622
  %v993 = vunpack.c.l.b16 %v623
  %v994 = vunpack.c.h.b16 %v623
  %v995 = vunpack.c.l.b16 %v624
  %v996 = vunpack.c.h.b16 %v624
  %v997 = vunpack.c.l.b16 %v625
  %v998 = vunpack.c.h.b16 %v625
  %v999 = vunpack.c.l.b16 %v626
  %v1000 = vunpack.c.h.b16 %v626
  %v1001 = vunpack.c.l.b16 %v627
  %v1002 = vunpack.c.h.b16 %v627
  %v1003 = vunpack.c.l.b16 %v628
  %v1004 = vunpack.c.h.b16 %v628
  %v1005 = vunpack.c.l.b16 %v629
  %v1006 = vunpack.c.h.b16 %v629
  %v1007 = vunpack.c.l.b16 %v630
  %v1008 = vunpack.c.h.b16 %v630
  %v1009 = vunpack.c.l.b16 %v631
  %v1010 = vunpack.c.h.b16 %v631
  %v1011 = vunpack.c.l.b16 %v632
  %v1012 = vunpack.c.h.b16 %v632
  %v1013 = vunpack.c.l.b16 %v633
  %v1014 = vunpack.c.h.b16 %v633
  %v1015 = vunpack.c.l.b16 %v634
  %v1016 = vunpack.c.h.b16 %v634
  %v1017 = vunpack.c.l.b16 %v635
  %v1018 = vunpack.c.h.b16 %v635
  %v1019 = vunpack.c.l.b16 %v636
  %v1020 = vunpack.c.h.b16 %v636
  %v1021 = vunpack.c.l.b16 %v637
  %v1022 = vunpack.c.h.b16 %v637
  %v1023 = vunpack.c.l.b16 %v638
  %v1024 = vunpack.c.h.b16 %v638
  %v1025 = vunpack.c.l.b16 %v639
  %v1026 = vunpack.c.h.b16 %v639
  %v1027 = vunpack.c.l.b16 %v640
  %v1028 = vunpack.c.h.b16 %v640
  %v1029 = vunpack.c.l.b16 %v641
  %v1030 = vunpack.c.h.b16 %v641
  %v1031 = vunpack.c.l.b16 %v642
  %v1032 = vunpack.c.h.b16 %v642
  %v1033 = vunpack.c.l.b16 %v643
  %v1034 = vunpack.c.h.b16 %v643
  %v1035 = vunpack.c.l.b16 %v644
  %v1036 = vunpack.c.h.b16 %v644
  %v1037 = vunpack.c.l.b16 %v645
  %v1038 = vunpack.c.h.b16 %v645
  %v1039 = vunpack.c.l.b16 %v646
  %v1040 = vunpack.c.h.b16 %v646
  %v1041 = vunpack.c.l.b16 %v647
  %v1042 = vunpack.c.h.b16 %v647
  %v1043 = vunpack.c.l.b16 %v648
  %v1044 = vunpack.c.h.b16 %v648
  %v1045 = vunpack.c.l.b16 %v649
  %v1046 = vunpack.c.h.b16 %v649
  %v1047 = vunpack.c.l.b16 %v650
  %v1048 = vunpack.c.h.b16 %v650
  %v1049 = vunpack.c.l.b16 %v651
  %v1050 = vunpack.c.h.b16 %v651
  %v1051 = vunpack.c.l.b16 %v652
  %v1052 = vunpack.c.h.b16 %v652
  %v1053 = vunpack.c.l.b16 %v653
  %v1054 = vunpack.c.h.b16 %v653
  %v1055 = vunpack.c.l.b16 %v654
  %v1056 = vunpack.c.h.b16 %v654
  %v1057 = vunpack.c.l.b16 %v655
  %v1058 = vunpack.c.h.b16 %v655
  %v1059 = vunpack.c.l.b16 %v656
  %v1060 = vunpack.c.h.b16 %v656
  %v1061 = vunpack.c.l.b16 %v657
  %v1062 = vunpack.c.h.b16 %v657
  %v1063 = vunpack.c.l.b16 %v658
  %v1064 = vunpack.c.h.b16 %v658
  %v1065 = vpack.c.b16 %v813, %v809
  %v1066 = vpack.c.b16 %v814, %v810
  %v1067 = vpack.c.b16 %v815, %v811
  %v1068 = vpack.c.b16 %v816, %v812
  %v1069 = vpack.c.b16 %v821, %v817
  %v1070 = vpack.c.b16 %v822, %v818
  %v1071 = vpack.c.b16 %v823, %v819
  %v1072 = vpack.c.b16 %v824, %v820
  %v1073 = vpack.c.b16 %v829, %v825
  %v1074 = vpack.c.b16 %v830, %v826
  %v1075 = vpack.c.b16 %v831, %v827
  %v1076 = vpack.c.b16 %v832, %v828
  %v1077 = vpack.c.b16 %v837, %v833
  %v1078 = vpack.c.b16 %v838, %v834
  %v1079 = vpack.c.b16 %v839, %v835
  %v1080 = vpack.c.b16 %v840, %v836
  %v1081 = vpack.c.b16 %v845, %v841
  %v1082 = vpack.c.b16 %v846, %v842
  %v1083 = vpack.c.b16 %v847, %v843
  %v1084 = vpack.c.b16 %v848, %v844
  %v1085 = vpack.c.b16 %v853, %v849
  %v1086 = vpack.c.b16 %v854, %v850
  %v1087 = vpack.c.b16 %v855, %v851
  %v1088 = vpack.c.b16 %v856, %v852
  %v1089 = vpack.c.b16 %v861, %v857
  %v1090 = vpack.c.b16 %v862, %v858
  %v1091 = vpack.c.b16 %v863, %v859
  %v1092 = vpack.c.b16 %v864, %v860
  %v1093 = vpack.c.b16 %v869, %v865
  %v1094 = vpack.c.b16 %v870, %v866
  %v1095 = vpack.c.b16 %v871, %v867
  %v1096 = vpack.c.b16 %v872, %v868
  %v1097 = vpack.c.b16 %v877, %v873
  %v1098 = vpack.c.b16 %v878, %v874
  %v1099 = vpack.c.b16 %v879, %v875
  %v1100 = vpack.c.b16 %v880, %v876
  %v1101 = vpack.c.b16 %v885, %v881
  %v1102 = vpack.c.b16 %v886, %v882
  %v1103 = vpack.c.b16 %v887, %v883
  %v1104 = vpack.c.b16 %v888, %v884
  %v1105 = vpack.c.b16 %v893, %v889
  %v1106 = vpack.c.b16 %v894, %v890
  %v1107 = vpack.c.b16 %v895, %v891
  %v1108 = vpack.c.b16 %v896, %v892
  %v1109 = vpack.c.b16 %v901, %v897
  %v1110 = vpack.c.b16 %v902, %v898
  %v1111 = vpack.c.b16 %v903, %v899
  %v1112 = vpack.c.b16 %v904, %v900
  %v1113 = vpack.c.b16 %v909, %v905
  %v1114 = vpack.c.b16 %v910, %v906
  %v1115 = vpack.c.b16 %v911, %v907
  %v1116 = vpack.c.b16 %v912, %v908
  %v1117 = vpack.c.b16 %v917, %v913
  %v1118 = vpack.c.b16 %v918, %v914
  %v1119 = vpack.c.b16 %v919, %v915
  %v1120 = vpack.c.b16 %v920, %v916
  %v1121 = vpack.c.b16 %v925, %v921
  %v1122 = vpack.c.b16 %v926, %v922
  %v1123 = vpack.c.b16 %v927, %v923
  %v1124 = vpack.c.b16 %v928, %v924
  %v1125 = vpack.c.b16 %v933, %v929
  %v1126 = vpack.c.b16 %v934, %v930
  %v1127 = vpack.c.b16 %v935, %v931
  %v1128 = vpack.c.b16 %v936, %v932
  %v1129 = vpack.c.b16 %v941, %v937
  %v1130 = vpack.c.b16 %v942, %v938
  %v1131 = vpack.c.b16 %v943, %v939
  %v1132 = vpack.c.b16 %v944, %v940
  %v1133 = vpack.c.b16 %v949, %v945
  %v1134 = vpack.c.b16 %v950, %v946
  %v1135 = vpack.c.b16 %v951, %v947
  %v1136 = vpack.c.b16 %v952, %v948
  %v1137 = vpack.c.b16 %v957, %v953
  %v1138 = vpack.c.b16 %v958, %v954
  %v1139 = vpack.c.b16 %v959, %v955
  %v1140 = vpack.c.b16 %v960, %v956
  %v1141 = vpack.c.b16 %v965, %v961
  %v1142 = vpack.c.b16 %v966, %v962
  %v1143 = vpack.c.b16 %v967, %v963
  %v1144 = vpack.c.b16 %v968, %v964
  %v1145 = vpack.c.b16 %v973, %v969
  %v1146 = vpack.c.b16 %v974, %v970
  %v1147 = vpack.c.b16 %v975, %v971
  %v1148 = vpack.c.b16 %v976, %v972
  %v1149 = vpack.c.b16 %v981, %v977
  %v1150 = vpack.c.b16 %v982, %v978
  %v1151 = vpack.c.b16 %v983, %v979
  %v1152 = vpack.c.b16 %v984, %v980
  %v1153 = vpack.c.b16 %v989, %v985
  %v1154 = vpack.c.b16 %v990, %v986
  %v1155 = vpack.c.b16 %v991, %v987
  %v1156 = vpack.c.b16 %v992, %v988
  %v1157 = vpack.c.b16 %v997, %v993
  %v1158 = vpack.c.b16 %v998, %v994
  %v1159 = vpack.c.b16 %v999, %v995
  %v1160 = vpack.c.b16 %v1000, %v996
  %v1161 = vpack.c.b16 %v1005, %v1001
  %v1162 = vpack.c.b16 %v1006, %v1002
  %v1163 = vpack.c.b16 %v1007, %v1003
  %v1164 = vpack.c.b16 %v1008, %v1004
  %v1165 = vpack.c.b16 %v1013, %v1009
  %v1166 = vpack.c.b16 %v1014, %v1010
  %v1167 = vpack.c.b16 %v1015, %v1011
  %v1168 = vpack.c.b16 %v1016, %v1012
  %v1169 = vpack.c.b16 %v1021, %v1017
  %v1170 = vpack.c.b16 %v1022, %v1018
  %v1171 = vpack.c.b16 %v1023, %v1019
  %v1172 = vpack.c.b16 %v1024, %v1020
  %v1173 = vpack.c.b16 %v1029, %v1025
  %v1174 = vpack.c.b16 %v1030, %v1026
  %v1175 = vpack.c.b16 %v1031, %v1027
  %v1176 = vpack.c.b16 %v1032, %v1028
  %v1177 = vpack.c.b16 %v1037, %v1033
  %v1178 = vpack.c.b16 %v1038, %v1034
  %v1179 = vpack.c.b16 %v1039, %v1035
  %v1180 = vpack.c.b16 %v1040, %v1036
  %v1181 = vpack.c.b16 %v1045, %v1041
  %v1182 = vpack.c.b16 %v1046, %v1042
  %v1183 = vpack.c.b16 %v1047, %v1043
  %v1184 = vpack.c.b16 %v1048, %v1044
  %v1185 = vpack.c.b16 %v1053, %v1049
  %v1186 = vpack.c.b16 %v1054, %v1050
  %v1187 = vpack.c.b16 %v1055, %v1051
  %v1188 = vpack.c.b16 %v1056, %v1052
  %v1189 = vpack.c.b16 %v1061, %v1057
  %v1190 = vpack.c.b16 %v1062, %v1058
  %v1191 = vpack.c.b16 %v1063, %v1059
  %v1192 = vpack.c.b16 %v1064, %v1060
  %1321 = vmatprep.subr.bf16.mxu0 %v1066
  %1322 = vmatpush1.bf16.msra.mxu0 %v1065
  %1323 = vmatprep.subr.bf16.mxu0 %v1070
  %1324 = vmatpush1.bf16.msra.mxu0 %v1069
  %1325 = vmatprep.subr.bf16.mxu0 %v1074
  %1326 = vmatpush1.bf16.msra.mxu0 %v1073
  %1327 = vmatprep.subr.bf16.mxu0 %v1078
  %1328 = vmatpush1.bf16.msra.mxu0 %v1077
  %1329 = vmatprep.subr.bf16.mxu0 %v1082
  %1330 = vmatpush1.bf16.msra.mxu0 %v1081
  %1331 = vmatprep.subr.bf16.mxu0 %v1086
  %1332 = vmatpush1.bf16.msra.mxu0 %v1085
  %1333 = vmatprep.subr.bf16.mxu0 %v1090
  %1334 = vmatpush1.bf16.msra.mxu0 %v1089
  %1335 = vmatprep.subr.bf16.mxu0 %v1094
  %1336 = vmatpush1.bf16.msra.mxu0 %v1093
  %1337 = vmatprep.subr.bf16.mxu0 %v1098
  %1338 = vmatpush1.bf16.msra.mxu0 %v1097
  %1339 = vmatprep.subr.bf16.mxu0 %v1102
  %1340 = vmatpush1.bf16.msra.mxu0 %v1101
  %1341 = vmatprep.subr.bf16.mxu0 %v1106
  %1342 = vmatpush1.bf16.msra.mxu0 %v1105
  %1343 = vmatprep.subr.bf16.mxu0 %v1110
  %1344 = vmatpush1.bf16.msra.mxu0 %v1109
  %1345 = vmatprep.subr.bf16.mxu0 %v1114
  %1346 = vmatpush1.bf16.msra.mxu0 %v1113
  %1347 = vmatprep.subr.bf16.mxu0 %v1118
  %1348 = vmatpush1.bf16.msra.mxu0 %v1117
  %1349 = vmatprep.subr.bf16.mxu0 %v1122
  %1350 = vmatpush1.bf16.msra.mxu0 %v1121
  %1351 = vmatprep.subr.bf16.mxu0 %v1126
  %1352 = vmatpush1.bf16.msra.mxu0 %v1125
  %1353 = vmatprep.mubr.bf16.mxu0 %v528
  %1354 = vmatmul.mubr.bf16.gmra.mrb[0].mxu0 %v527
  %v1355 = vpop.f32.mrb[0].mxu0
  %v1356 = vadd.f32 %v664, %v1355
  %v1357 = vpop.f32.mrb[0].mxu0
  %v1358 = vadd.f32 %v668, %v1357
  %v1359 = vpop.f32.mrb[0].mxu0
  %v1360 = vpop.f32.mrb[0].mxu0
  %1361 = vdwg.mxu0
  %1362 = vmatprep.subr.bf16.mxu0 %v1130
  %1363 = vmatpush1.bf16.msra.mxu0 %v1129
  %1364 = vmatprep.subr.bf16.mxu0 %v1134
  %1365 = vmatpush1.bf16.msra.mxu0 %v1133
  %1366 = vmatprep.subr.bf16.mxu0 %v1138
  %1367 = vmatpush1.bf16.msra.mxu0 %v1137
  %1368 = vmatprep.subr.bf16.mxu0 %v1142
  %1369 = vmatpush1.bf16.msra.mxu0 %v1141
  %1370 = vmatprep.subr.bf16.mxu0 %v1146
  %1371 = vmatpush1.bf16.msra.mxu0 %v1145
  %1372 = vmatprep.subr.bf16.mxu0 %v1150
  %1373 = vmatpush1.bf16.msra.mxu0 %v1149
  %1374 = vmatprep.subr.bf16.mxu0 %v1154
  %1375 = vmatpush1.bf16.msra.mxu0 %v1153
  %1376 = vmatprep.subr.bf16.mxu0 %v1158
  %1377 = vmatpush1.bf16.msra.mxu0 %v1157
  %1378 = vmatprep.subr.bf16.mxu0 %v1162
  %1379 = vmatpush1.bf16.msra.mxu0 %v1161
  %1380 = vmatprep.subr.bf16.mxu0 %v1166
  %1381 = vmatpush1.bf16.msra.mxu0 %v1165
  %1382 = vmatprep.subr.bf16.mxu0 %v1170
  %1383 = vmatpush1.bf16.msra.mxu0 %v1169
  %1384 = vmatprep.subr.bf16.mxu0 %v1174
  %1385 = vmatpush1.bf16.msra.mxu0 %v1173
  %1386 = vmatprep.subr.bf16.mxu0 %v1178
  %1387 = vmatpush1.bf16.msra.mxu0 %v1177
  %1388 = vmatprep.subr.bf16.mxu0 %v1182
  %1389 = vmatpush1.bf16.msra.mxu0 %v1181
  %1390 = vmatprep.subr.bf16.mxu0 %v1186
  %1391 = vmatpush1.bf16.msra.mxu0 %v1185
  %1392 = vmatprep.subr.bf16.mxu0 %v1190
  %1393 = vmatpush1.bf16.msra.mxu0 %v1189
  %1394 = vmatprep.mubr.bf16.mxu0 %v530
  %1395 = vmatmul.mubr.bf16.gmra.mrb[0].mxu0 %v529
  %v1396 = vpop.f32.mrb[0].mxu0
  %v1397 = vadd.f32 %v1356, %v1396
  %v1398 = vpop.f32.mrb[0].mxu0
  %v1399 = vadd.f32 %v1358, %v1398
  %v1400 = vpop.f32.mrb[0].mxu0
  %v1401 = vpop.f32.mrb[0].mxu0
  %1402 = vdwg.mxu0
  %1403 = vmatprep.subr.bf16.mxu0 %v1068
  %1404 = vmatpush1.bf16.msra.mxu0 %v1067
  %1405 = vmatprep.subr.bf16.mxu0 %v1072
  %1406 = vmatpush1.bf16.msra.mxu0 %v1071
  %1407 = vmatprep.subr.bf16.mxu0 %v1076
  %1408 = vmatpush1.bf16.msra.mxu0 %v1075
  %1409 = vmatprep.subr.bf16.mxu0 %v1080
  %1410 = vmatpush1.bf16.msra.mxu0 %v1079
  %1411 = vmatprep.subr.bf16.mxu0 %v1084
  %1412 = vmatpush1.bf16.msra.mxu0 %v1083
  %1413 = vmatprep.subr.bf16.mxu0 %v1088
  %1414 = vmatpush1.bf16.msra.mxu0 %v1087
  %1415 = vmatprep.subr.bf16.mxu0 %v1092
  %1416 = vmatpush1.bf16.msra.mxu0 %v1091
  %1417 = vmatprep.subr.bf16.mxu0 %v1096
  %1418 = vmatpush1.bf16.msra.mxu0 %v1095
  %1419 = vmatprep.subr.bf16.mxu0 %v1100
  %1420 = vmatpush1.bf16.msra.mxu0 %v1099
  %1421 = vmatprep.subr.bf16.mxu0 %v1104
  %1422 = vmatpush1.bf16.msra.mxu0 %v1103
  %1423 = vmatprep.subr.bf16.mxu0 %v1108
  %1424 = vmatpush1.bf16.msra.mxu0 %v1107
  %1425 = vmatprep.subr.bf16.mxu0 %v1112
  %1426 = vmatpush1.bf16.msra.mxu0 %v1111
  %1427 = vmatprep.subr.bf16.mxu0 %v1116
  %1428 = vmatpush1.bf16.msra.mxu0 %v1115
  %1429 = vmatprep.subr.bf16.mxu0 %v1120
  %1430 = vmatpush1.bf16.msra.mxu0 %v1119
  %1431 = vmatprep.subr.bf16.mxu0 %v1124
  %1432 = vmatpush1.bf16.msra.mxu0 %v1123
  %1433 = vmatprep.subr.bf16.mxu0 %v1128
  %1434 = vmatpush1.bf16.msra.mxu0 %v1127
  %1435 = vmatprep.mubr.bf16.mxu0 %v528
  %1436 = vmatmul.mubr.bf16.gmra.mrb[0].mxu0 %v527
  %v1437 = vpop.f32.mrb[0].mxu0
  %v1438 = vadd.f32 %v672, %v1437
  %v1439 = vpop.f32.mrb[0].mxu0
  %v1440 = vadd.f32 %v676, %v1439
  %v1441 = vpop.f32.mrb[0].mxu0
  %v1442 = vpop.f32.mrb[0].mxu0
  %1443 = vdwg.mxu0
  %1444 = vmatprep.subr.bf16.mxu0 %v1132
  %1445 = vmatpush1.bf16.msra.mxu0 %v1131
  %1446 = vmatprep.subr.bf16.mxu0 %v1136
  %1447 = vmatpush1.bf16.msra.mxu0 %v1135
  %1448 = vmatprep.subr.bf16.mxu0 %v1140
  %1449 = vmatpush1.bf16.msra.mxu0 %v1139
  %1450 = vmatprep.subr.bf16.mxu0 %v1144
  %1451 = vmatpush1.bf16.msra.mxu0 %v1143
  %1452 = vmatprep.subr.bf16.mxu0 %v1148
  %1453 = vmatpush1.bf16.msra.mxu0 %v1147
  %1454 = vmatprep.subr.bf16.mxu0 %v1152
  %1455 = vmatpush1.bf16.msra.mxu0 %v1151
  %1456 = vmatprep.subr.bf16.mxu0 %v1156
  %1457 = vmatpush1.bf16.msra.mxu0 %v1155
  %1458 = vmatprep.subr.bf16.mxu0 %v1160
  %1459 = vmatpush1.bf16.msra.mxu0 %v1159
  %1460 = vmatprep.subr.bf16.mxu0 %v1164
  %1461 = vmatpush1.bf16.msra.mxu0 %v1163
  %1462 = vmatprep.subr.bf16.mxu0 %v1168
  %1463 = vmatpush1.bf16.msra.mxu0 %v1167
  %1464 = vmatprep.subr.bf16.mxu0 %v1172
  %1465 = vmatpush1.bf16.msra.mxu0 %v1171
  %1466 = vmatprep.subr.bf16.mxu0 %v1176
  %1467 = vmatpush1.bf16.msra.mxu0 %v1175
  %1468 = vmatprep.subr.bf16.mxu0 %v1180
  %1469 = vmatpush1.bf16.msra.mxu0 %v1179
  %1470 = vmatprep.subr.bf16.mxu0 %v1184
  %1471 = vmatpush1.bf16.msra.mxu0 %v1183
  %1472 = vmatprep.subr.bf16.mxu0 %v1188
  %1473 = vmatpush1.bf16.msra.mxu0 %v1187
  %1474 = vmatprep.subr.bf16.mxu0 %v1192
  %1475 = vmatpush1.bf16.msra.mxu0 %v1191
  %1476 = vmatprep.mubr.bf16.mxu0 %v530
  %1477 = vmatmul.mubr.bf16.gmra.mrb[0].mxu0 %v529
  %v1478 = vpop.f32.mrb[0].mxu0
  %v1479 = vadd.f32 %v1438, %v1478
  %v1480 = vpop.f32.mrb[0].mxu0
  %v1481 = vadd.f32 %v1440, %v1480
  %v1482 = vpop.f32.mrb[0].mxu0
  %v1483 = vpop.f32.mrb[0].mxu0
  %1484 = vdwg.mxu0
  %v1485 = vmax.f32 %v1397, 0.0
  %v1486 = vmax.f32 %v1399, 0.0
  %v1487 = vmax.f32 %v1479, 0.0
  %v1488 = vmax.f32 %v1481, 0.0
  %v1489 = vpack.c.bf16 %v1485, %v1485
  %v1490 = vpack.c.bf16 %v1486, %v1486
  %v1491 = vpack.c.bf16 %v1487, %v1487
  %v1492 = vpack.c.bf16 %v1488, %v1488
  %v1493 = vld [vmem:[%s5] sm:$0xf]
  %v1494 = vld [vmem:[%s5 + $0x4] sm:$0xf]
  %v1495 = vld [vmem:[%s5 + $0x8] sm:$0xf]
  %v1496 = vld [vmem:[%s5 + $0xc] sm:$0xf]
  %v1497 = vld [vmem:[%s5 + $0x10] sm:$0xf]
  %v1498 = vld [vmem:[%s5 + $0x14] sm:$0xf]
  %v1499 = vld [vmem:[%s5 + $0x18] sm:$0xf]
  %v1500 = vld [vmem:[%s5 + $0x1c] sm:$0xf]
  %v1501 = vld [vmem:[%s5 + $0x20] sm:$0xf]
  %v1502 = vld [vmem:[%s5 + $0x24] sm:$0xf]
  %v1503 = vld [vmem:[%s5 + $0x28] sm:$0xf]
  %v1504 = vld [vmem:[%s5 + $0x2c] sm:$0xf]
  %v1505 = vld [vmem:[%s5 + $0x30] sm:$0xf]
  %v1506 = vld [vmem:[%s5 + $0x34] sm:$0xf]
  %v1507 = vld [vmem:[%s5 + $0x38] sm:$0xf]
  %v1508 = vld [vmem:[%s5 + $0x3c] sm:$0xf]
  %v1509 = vld [vmem:[%s5 + $0x40] sm:$0xf]
  %v1510 = vld [vmem:[%s5 + $0x44] sm:$0xf]
  %v1511 = vld [vmem:[%s5 + $0x48] sm:$0xf]
  %v1512 = vld [vmem:[%s5 + $0x4c] sm:$0xf]
  %v1513 = vld [vmem:[%s5 + $0x50] sm:$0xf]
  %v1514 = vld [vmem:[%s5 + $0x54] sm:$0xf]
  %v1515 = vld [vmem:[%s5 + $0x58] sm:$0xf]
  %v1516 = vld [vmem:[%s5 + $0x5c] sm:$0xf]
  %v1517 = vld [vmem:[%s5 + $0x60] sm:$0xf]
  %v1518 = vld [vmem:[%s5 + $0x64] sm:$0xf]
  %v1519 = vld [vmem:[%s5 + $0x68] sm:$0xf]
  %v1520 = vld [vmem:[%s5 + $0x6c] sm:$0xf]
  %v1521 = vld [vmem:[%s5 + $0x70] sm:$0xf]
  %v1522 = vld [vmem:[%s5 + $0x74] sm:$0xf]
  %v1523 = vld [vmem:[%s5 + $0x78] sm:$0xf]
  %v1524 = vld [vmem:[%s5 + $0x7c] sm:$0xf]
  %v1525 = vld [vmem:[%s5 + $0x80] sm:$0xf]
  %v1526 = vld [vmem:[%s5 + $0x84] sm:$0xf]
  %v1527 = vld [vmem:[%s5 + $0x88] sm:$0xf]
  %v1528 = vld [vmem:[%s5 + $0x8c] sm:$0xf]
  %v1529 = vld [vmem:[%s5 + $0x90] sm:$0xf]
  %v1530 = vld [vmem:[%s5 + $0x94] sm:$0xf]
  %v1531 = vld [vmem:[%s5 + $0x98] sm:$0xf]
  %v1532 = vld [vmem:[%s5 + $0x9c] sm:$0xf]
  %v1533 = vld [vmem:[%s5 + $0xa0] sm:$0xf]
  %v1534 = vld [vmem:[%s5 + $0xa4] sm:$0xf]
  %v1535 = vld [vmem:[%s5 + $0xa8] sm:$0xf]
  %v1536 = vld [vmem:[%s5 + $0xac] sm:$0xf]
  %v1537 = vld [vmem:[%s5 + $0xb0] sm:$0xf]
  %v1538 = vld [vmem:[%s5 + $0xb4] sm:$0xf]
  %v1539 = vld [vmem:[%s5 + $0xb8] sm:$0xf]
  %v1540 = vld [vmem:[%s5 + $0xbc] sm:$0xf]
  %v1541 = vld [vmem:[%s5 + $0xc0] sm:$0xf]
  %v1542 = vld [vmem:[%s5 + $0xc4] sm:$0xf]
  %v1543 = vld [vmem:[%s5 + $0xc8] sm:$0xf]
  %v1544 = vld [vmem:[%s5 + $0xcc] sm:$0xf]
  %v1545 = vld [vmem:[%s5 + $0xd0] sm:$0xf]
  %v1546 = vld [vmem:[%s5 + $0xd4] sm:$0xf]
  %v1547 = vld [vmem:[%s5 + $0xd8] sm:$0xf]
  %v1548 = vld [vmem:[%s5 + $0xdc] sm:$0xf]
  %v1549 = vld [vmem:[%s5 + $0xe0] sm:$0xf]
  %v1550 = vld [vmem:[%s5 + $0xe4] sm:$0xf]
  %v1551 = vld [vmem:[%s5 + $0xe8] sm:$0xf]
  %v1552 = vld [vmem:[%s5 + $0xec] sm:$0xf]
  %v1553 = vld [vmem:[%s5 + $0xf0] sm:$0xf]
  %v1554 = vld [vmem:[%s5 + $0xf4] sm:$0xf]
  %v1555 = vld [vmem:[%s5 + $0xf8] sm:$0xf]
  %v1556 = vld [vmem:[%s5 + $0xfc] sm:$0xf]
  %v1557 = vld [vmem:[%s6] sm:$0x1]
  %v1559 = vlaneseq
  %v1560 = vshrl.u32 %v1559, 7
  %v1561 = vsub.s32 0, %v1560
  %v1562 = vrot.slane %v1557, %v1561
  %v1628 = vunpack.c.l.b16 %v1493
  %v1629 = vunpack.c.l.b16 %v1494
  %v1630 = vunpack.c.l.b16 %v1495
  %v1631 = vunpack.c.l.b16 %v1496
  %v1632 = vunpack.c.l.b16 %v1497
  %v1633 = vunpack.c.l.b16 %v1498
  %v1634 = vunpack.c.l.b16 %v1499
  %v1635 = vunpack.c.l.b16 %v1500
  %v1636 = vunpack.c.l.b16 %v1501
  %v1637 = vunpack.c.l.b16 %v1502
  %v1638 = vunpack.c.l.b16 %v1503
  %v1639 = vunpack.c.l.b16 %v1504
  %v1640 = vunpack.c.l.b16 %v1505
  %v1641 = vunpack.c.l.b16 %v1506
  %v1642 = vunpack.c.l.b16 %v1507
  %v1643 = vunpack.c.l.b16 %v1508
  %v1644 = vunpack.c.l.b16 %v1509
  %v1645 = vunpack.c.l.b16 %v1510
  %v1646 = vunpack.c.l.b16 %v1511
  %v1647 = vunpack.c.l.b16 %v1512
  %v1648 = vunpack.c.l.b16 %v1513
  %v1649 = vunpack.c.l.b16 %v1514
  %v1650 = vunpack.c.l.b16 %v1515
  %v1651 = vunpack.c.l.b16 %v1516
  %v1652 = vunpack.c.l.b16 %v1517
  %v1653 = vunpack.c.l.b16 %v1518
  %v1654 = vunpack.c.l.b16 %v1519
  %v1655 = vunpack.c.l.b16 %v1520
  %v1656 = vunpack.c.l.b16 %v1521
  %v1657 = vunpack.c.l.b16 %v1522
  %v1658 = vunpack.c.l.b16 %v1523
  %v1659 = vunpack.c.l.b16 %v1524
  %v1660 = vunpack.c.l.b16 %v1525
  %v1661 = vunpack.c.l.b16 %v1526
  %v1662 = vunpack.c.l.b16 %v1527
  %v1663 = vunpack.c.l.b16 %v1528
  %v1664 = vunpack.c.l.b16 %v1529
  %v1665 = vunpack.c.l.b16 %v1530
  %v1666 = vunpack.c.l.b16 %v1531
  %v1667 = vunpack.c.l.b16 %v1532
  %v1668 = vunpack.c.l.b16 %v1533
  %v1669 = vunpack.c.l.b16 %v1534
  %v1670 = vunpack.c.l.b16 %v1535
  %v1671 = vunpack.c.l.b16 %v1536
  %v1672 = vunpack.c.l.b16 %v1537
  %v1673 = vunpack.c.l.b16 %v1538
  %v1674 = vunpack.c.l.b16 %v1539
  %v1675 = vunpack.c.l.b16 %v1540
  %v1676 = vunpack.c.l.b16 %v1541
  %v1677 = vunpack.c.l.b16 %v1542
  %v1678 = vunpack.c.l.b16 %v1543
  %v1679 = vunpack.c.l.b16 %v1544
  %v1680 = vunpack.c.l.b16 %v1545
  %v1681 = vunpack.c.l.b16 %v1546
  %v1682 = vunpack.c.l.b16 %v1547
  %v1683 = vunpack.c.l.b16 %v1548
  %v1684 = vunpack.c.l.b16 %v1549
  %v1685 = vunpack.c.l.b16 %v1550
  %v1686 = vunpack.c.l.b16 %v1551
  %v1687 = vunpack.c.l.b16 %v1552
  %v1688 = vunpack.c.l.b16 %v1553
  %v1689 = vunpack.c.l.b16 %v1554
  %v1690 = vunpack.c.l.b16 %v1555
  %v1691 = vunpack.c.l.b16 %v1556
  %v1692 = vpack.c.b16 %v1629, %v1628
  %v1693 = vpack.c.b16 %v1631, %v1630
  %v1694 = vpack.c.b16 %v1633, %v1632
  %v1695 = vpack.c.b16 %v1635, %v1634
  %v1696 = vpack.c.b16 %v1637, %v1636
  %v1697 = vpack.c.b16 %v1639, %v1638
  %v1698 = vpack.c.b16 %v1641, %v1640
  %v1699 = vpack.c.b16 %v1643, %v1642
  %v1700 = vpack.c.b16 %v1645, %v1644
  %v1701 = vpack.c.b16 %v1647, %v1646
  %v1702 = vpack.c.b16 %v1649, %v1648
  %v1703 = vpack.c.b16 %v1651, %v1650
  %v1704 = vpack.c.b16 %v1653, %v1652
  %v1705 = vpack.c.b16 %v1655, %v1654
  %v1706 = vpack.c.b16 %v1657, %v1656
  %v1707 = vpack.c.b16 %v1659, %v1658
  %v1708 = vpack.c.b16 %v1661, %v1660
  %v1709 = vpack.c.b16 %v1663, %v1662
  %v1710 = vpack.c.b16 %v1665, %v1664
  %v1711 = vpack.c.b16 %v1667, %v1666
  %v1712 = vpack.c.b16 %v1669, %v1668
  %v1713 = vpack.c.b16 %v1671, %v1670
  %v1714 = vpack.c.b16 %v1673, %v1672
  %v1715 = vpack.c.b16 %v1675, %v1674
  %v1716 = vpack.c.b16 %v1677, %v1676
  %v1717 = vpack.c.b16 %v1679, %v1678
  %v1718 = vpack.c.b16 %v1681, %v1680
  %v1719 = vpack.c.b16 %v1683, %v1682
  %v1720 = vpack.c.b16 %v1685, %v1684
  %v1721 = vpack.c.b16 %v1687, %v1686
  %v1722 = vpack.c.b16 %v1689, %v1688
  %v1723 = vpack.c.b16 %v1691, %v1690
  %1756 = vmatprep.subr.bf16.mxu0 0
  %1757 = vmatpush1.bf16.msra.mxu0 %v1692
  %1758 = vmatprep.subr.bf16.mxu0 0
  %1759 = vmatpush1.bf16.msra.mxu0 %v1693
  %1760 = vmatprep.subr.bf16.mxu0 0
  %1761 = vmatpush1.bf16.msra.mxu0 %v1694
  %1762 = vmatprep.subr.bf16.mxu0 0
  %1763 = vmatpush1.bf16.msra.mxu0 %v1695
  %1764 = vmatprep.subr.bf16.mxu0 0
  %1765 = vmatpush1.bf16.msra.mxu0 %v1696
  %1766 = vmatprep.subr.bf16.mxu0 0
  %1767 = vmatpush1.bf16.msra.mxu0 %v1697
  %1768 = vmatprep.subr.bf16.mxu0 0
  %1769 = vmatpush1.bf16.msra.mxu0 %v1698
  %1770 = vmatprep.subr.bf16.mxu0 0
  %1771 = vmatpush1.bf16.msra.mxu0 %v1699
  %1772 = vmatprep.subr.bf16.mxu0 0
  %1773 = vmatpush1.bf16.msra.mxu0 %v1700
  %1774 = vmatprep.subr.bf16.mxu0 0
  %1775 = vmatpush1.bf16.msra.mxu0 %v1701
  %1776 = vmatprep.subr.bf16.mxu0 0
  %1777 = vmatpush1.bf16.msra.mxu0 %v1702
  %1778 = vmatprep.subr.bf16.mxu0 0
  %1779 = vmatpush1.bf16.msra.mxu0 %v1703
  %1780 = vmatprep.subr.bf16.mxu0 0
  %1781 = vmatpush1.bf16.msra.mxu0 %v1704
  %1782 = vmatprep.subr.bf16.mxu0 0
  %1783 = vmatpush1.bf16.msra.mxu0 %v1705
  %1784 = vmatprep.subr.bf16.mxu0 0
  %1785 = vmatpush1.bf16.msra.mxu0 %v1706
  %1786 = vmatprep.subr.bf16.mxu0 0
  %1787 = vmatpush1.bf16.msra.mxu0 %v1707
  %1788 = vmatprep.mubr.bf16.mxu0 %v1490
  %1789 = vmatmul.mubr.bf16.gmra.mrb[0].mxu0 %v1489
  %v1790 = vpop.f32.mrb[0].mxu0
  %v1791 = vadd.f32 %v1562, %v1790
  %v1792 = vpop.f32.mrb[0].mxu0
  %v1793 = vpop.f32.mrb[0].mxu0
  %v1794 = vpop.f32.mrb[0].mxu0
  %1795 = vdwg.mxu0
  %1796 = vmatprep.subr.bf16.mxu0 0
  %1797 = vmatpush1.bf16.msra.mxu0 %v1708
  %1798 = vmatprep.subr.bf16.mxu0 0
  %1799 = vmatpush1.bf16.msra.mxu0 %v1709
  %1800 = vmatprep.subr.bf16.mxu0 0
  %1801 = vmatpush1.bf16.msra.mxu0 %v1710
  %1802 = vmatprep.subr.bf16.mxu0 0
  %1803 = vmatpush1.bf16.msra.mxu0 %v1711
  %1804 = vmatprep.subr.bf16.mxu0 0
  %1805 = vmatpush1.bf16.msra.mxu0 %v1712
  %1806 = vmatprep.subr.bf16.mxu0 0
  %1807 = vmatpush1.bf16.msra.mxu0 %v1713
  %1808 = vmatprep.subr.bf16.mxu0 0
  %1809 = vmatpush1.bf16.msra.mxu0 %v1714
  %1810 = vmatprep.subr.bf16.mxu0 0
  %1811 = vmatpush1.bf16.msra.mxu0 %v1715
  %1812 = vmatprep.subr.bf16.mxu0 0
  %1813 = vmatpush1.bf16.msra.mxu0 %v1716
  %1814 = vmatprep.subr.bf16.mxu0 0
  %1815 = vmatpush1.bf16.msra.mxu0 %v1717
  %1816 = vmatprep.subr.bf16.mxu0 0
  %1817 = vmatpush1.bf16.msra.mxu0 %v1718
  %1818 = vmatprep.subr.bf16.mxu0 0
  %1819 = vmatpush1.bf16.msra.mxu0 %v1719
  %1820 = vmatprep.subr.bf16.mxu0 0
  %1821 = vmatpush1.bf16.msra.mxu0 %v1720
  %1822 = vmatprep.subr.bf16.mxu0 0
  %1823 = vmatpush1.bf16.msra.mxu0 %v1721
  %1824 = vmatprep.subr.bf16.mxu0 0
  %1825 = vmatpush1.bf16.msra.mxu0 %v1722
  %1826 = vmatprep.subr.bf16.mxu0 0
  %1827 = vmatpush1.bf16.msra.mxu0 %v1723
  %1828 = vmatprep.mubr.bf16.mxu0 %v1492
  %1829 = vmatmul.mubr.bf16.gmra.mrb[0].mxu0 %v1491
  %v1830 = vpop.f32.mrb[0].mxu0
  %v1831 = vadd.f32 %v1791, %v1830
  %v1832 = vpop.f32.mrb[0].mxu0
  %v1833 = vpop.f32.mrb[0].mxu0
  %v1834 = vpop.f32.mrb[0].mxu0
  %1835 = vdwg.mxu0
  %1836 = vst [vmem:[%s7] sm:$0xff] %v1831
  // Predicated region
  $region30: #{stocknet_forward.1} parent=0 // pred_check
    _
  $region31: #{stocknet_forward.1} parent=0 // pred_check_branch
    %1838 = sbr.rel (0) target = $region33
  $region32: #{stocknet_forward.1} parent=0 // pred_region
    _
  $region33: #{stocknet_forward.1} parent=0 // pred_fallthru
    _
  // Predicated region
  $region34: #{stocknet_forward.1} parent=0 // pred_check
    _
  $region35: #{stocknet_forward.1} parent=0 // pred_check_branch
    %1840 = sbr.rel (0) target = $region37
  $region36: #{stocknet_forward.1} parent=0 // pred_region
    _
  $region37: #{stocknet_forward.1} parent=0 // pred_fallthru
    _

</llo_original>
